<compile_context>
chip_gen: v6e
topology: v6e:2x2x1
jax: 0.10.0
libtpu: 0.0.40
codegen_flags: <defaults>
</compile_context>

<pallas_src>
import numpy as np

import jax
import jax.numpy as jnp
from jax.experimental import pallas as pl
from jax.experimental.pallas import tpu as pltpu


# ----------------------------------------------------------------------------
# Fused Pallas kernel: whole Seg head for one (image, coarse-pixel tile).
# ----------------------------------------------------------------------------
def _silu(y):
    # sigmoid = 1 / (1 + exp(-y)); exp and the approximate reciprocal both run
    # on the EUP slot, keeping the VALU free for the surrounding adds/muls.
    return y * pl.reciprocal(1.0 + jnp.exp(-y), approx=True)


def _seg_head_kernel(x4_ref, x2_ref, x0_ref,
                     w1_ref, b1_ref,
                     w2a_ref, w2b_ref, b2_ref,
                     w3a4_ref, w3b4_ref, b3t_ref,
                     w4seg_ref, b4_ref,
                     o_ref):
    f32 = jnp.float32
    bf16 = jnp.bfloat16

    # ---- stage 1: conv1+BN+SiLU at coarse (pre-upsample) resolution --------
    c1 = _silu(jnp.dot(x4_ref[...], w1_ref[...], preferred_element_type=f32)
               + b1_ref[...])                                       # (TM, 128)

    # conv2 contribution of the conv1 branch: identical for all 4 children of
    # a coarse pixel (nearest upsample == broadcast), so compute it once.
    p2 = jnp.dot(c1.astype(bf16), w2a_ref[...],
                 preferred_element_type=f32)                        # (TM, 64)

    zs = []
    for s in range(4):                                              # child (si, sj)
        # ---- stage 2: conv2+BN+SiLU at 2x res (grouped by coarse parent) ---
        q2 = jnp.dot(x2_ref[s], w2b_ref[...],
                     preferred_element_type=f32)                    # (TM, 64)
        t2 = _silu(p2 + q2 + b2_ref[...])                           # (TM, 64)

        # ---- stage 3: conv3+BN+SiLU at 4x res; the 4 grandchildren (u) are
        #      lane-packed (4 x 16 channels = 64 lanes) ----------------------
        p3 = jnp.dot(t2.astype(bf16), w3a4_ref[...],
                     preferred_element_type=f32)                    # (TM, 64)
        q3 = jnp.dot(x0_ref[s], w3b4_ref[...],
                     preferred_element_type=f32)                    # (TM, 64)
        t3 = _silu(p3 + q3 + b3t_ref[...])                          # (TM, 64)

        # ---- stage 4: conv4 (16 -> 1) per grandchild as a segmented lane
        #      sum on the MXU (block-diagonal (64, 4) weight) ----------------
        z = jnp.dot(t3.astype(bf16), w4seg_ref[...],
                    preferred_element_type=f32)                     # (TM, 4)
        zs.append(_silu(z + b4_ref[...]))

    # lane g = s*4 + u; the wrapper reshapes 16 -> (si, sj, ui, uj).
    o_ref[...] = jnp.concatenate(zs, axis=-1)                       # (TM, 16)


# ----------------------------------------------------------------------------
# Host-side helpers
# ----------------------------------------------------------------------------
def make_conv_bn_params(key, cin, cout, eps=1e-5):
    """Deterministic Conv2d(bias=False)+BatchNorm2d params, BN pre-folded."""
    kw, kg, kb, km, kv = jax.random.split(key, 5)
    w = jax.random.normal(kw, (cin, cout), jnp.float32) * (1.0 / jnp.sqrt(cin))
    gamma = 1.0 + 0.1 * jax.random.normal(kg, (cout,), jnp.float32)
    beta = 0.1 * jax.random.normal(kb, (cout,), jnp.float32)
    mean = 0.1 * jax.random.normal(km, (cout,), jnp.float32)
    var = jnp.abs(jax.random.normal(kv, (cout,), jnp.float32)) + 0.5
    scale = gamma / jnp.sqrt(var + eps)    # folded BN scale
    bias = beta - mean * scale             # folded BN bias
    return w, scale, bias


def prepare_kernel_params(params):
    """Fold BN into weights, split concat weights, build the lane-packed
    stage-3/4 weights, cast MXU operands to bf16."""
    (w1, s1, b1), (w2, s2, b2), (w3, s3, b3), (w4, s4, b4) = params
    bf16, f32 = jnp.bfloat16, jnp.float32
    c1out = w1.shape[1]                    # 128: split point of conv2 input
    c2out = w2.shape[1]                    # 64 : split point of conv3 input
    c3out = w3.shape[1]                    # 16

    w1p = w1 * s1[None, :]
    w2p = w2 * s2[None, :]
    w3p = w3 * s3[None, :]
    w4p = (w4 * s4[None, :]).reshape(c3out)            # (16,)

    w2a, w2b = w2p[:c1out], w2p[c1out:]                # conv1-branch / x2-branch
    w3a, w3b = w3p[:c2out], w3p[c2out:]                # conv2-branch / x0-branch
    c3in_b = w3b.shape[0]                              # 64 (x0 channels)

    # 4 grandchildren (u) lane-packed: tiled / block-diagonal weights.
    w3a4 = jnp.tile(w3a, (1, 4))                                     # (64, 64)
    w3b4 = jnp.zeros((4 * c3in_b, 4 * c3out), f32)                   # (256, 64)
    w4seg = jnp.zeros((4 * c3out, 4), f32)                           # (64, 4)
    for u in range(4):
        w3b4 = w3b4.at[u * c3in_b:(u + 1) * c3in_b,
                       u * c3out:(u + 1) * c3out].set(w3b)
        w4seg = w4seg.at[u * c3out:(u + 1) * c3out, u].set(w4p)
    b3t = jnp.tile(b3.reshape(1, -1), (1, 4))                        # (1, 64)

    return dict(
        w1=w1p.astype(bf16), b1=b1.reshape(1, -1).astype(f32),
        w2a=w2a.astype(bf16), w2b=w2b.astype(bf16),
        b2=b2.reshape(1, -1).astype(f32),
        w3a4=w3a4.astype(bf16), w3b4=w3b4.astype(bf16),
        b3t=b3t.astype(f32),
        w4seg=w4seg.astype(bf16), b4=b4.reshape(1, 1).astype(f32),
    )


def _pick_tile(m0, cap=512):
    """Largest multiple of 8 that divides m0 (capped); fall back to full m0."""
    if m0 % 8 != 0:
        return m0                          # full-extent block is always legal
    tm = min(cap, m0) - (min(cap, m0) % 8)
    while m0 % tm != 0:
        tm -= 8
    return tm


# ----------------------------------------------------------------------------
# Seg forward
# ----------------------------------------------------------------------------
@jax.jit
def seg_forward(x4, x2, x0, kp):
    # x4: (N,256,H,W), x2: (N,128,2H,2W), x0: (N,64,4H,4W)   (NCHW, f32)
    N, C4, H, W = x4.shape
    C2, C0 = x2.shape[1], x0.shape[1]
    m0 = H * W
    bf16 = jnp.bfloat16

    # ---- group activations by coarse parent pixel (rows = coarse pixels) ----
    # x2g[n, s, p, :]      : x2 pixel that is child s=(si,sj) of coarse pixel p
    # x0g[n, s, p, u*64+c] : x0 pixel that is grandchild (s, u) of coarse pixel p
    # TODO(synk): in a full pipeline the upstream producers should emit these
    # grouped bf16 layouts directly so these transposes/casts disappear.
    x4f = jnp.transpose(x4, (0, 2, 3, 1)).reshape(N, m0, C4).astype(bf16)
    x2g = jnp.transpose(x2.reshape(N, C2, H, 2, W, 2),
                        (0, 3, 5, 2, 4, 1)).reshape(N, 4, m0, C2).astype(bf16)
    x0g = jnp.transpose(x0.reshape(N, C0, H, 2, 2, W, 2, 2),
                        (0, 3, 6, 2, 5, 4, 7, 1)).reshape(N, 4, m0, 4 * C0).astype(bf16)

    TM = _pick_tile(m0)
    grid = (N, m0 // TM)
    const = lambda n, i: (0, 0)
    wspec = lambda a: pl.BlockSpec(a.shape, const)

    out_pk = pl.pallas_call(
        _seg_head_kernel,
        out_shape=jax.ShapeDtypeStruct((N, m0, 16), jnp.float32),
        grid=grid,
        in_specs=[
            pl.BlockSpec((None, TM, C4), lambda n, i: (n, i, 0)),            # x4
            pl.BlockSpec((None, 4, TM, C2), lambda n, i: (n, 0, i, 0)),      # x2 grouped
            pl.BlockSpec((None, 4, TM, 4 * C0), lambda n, i: (n, 0, i, 0)),  # x0 grouped
            wspec(kp["w1"]), wspec(kp["b1"]),
            wspec(kp["w2a"]), wspec(kp["w2b"]), wspec(kp["b2"]),
            wspec(kp["w3a4"]), wspec(kp["w3b4"]), wspec(kp["b3t"]),
            wspec(kp["w4seg"]), wspec(kp["b4"]),
        ],
        out_specs=pl.BlockSpec((None, TM, 16), lambda n, i: (n, i, 0)),
        compiler_params=pltpu.CompilerParams(
            dimension_semantics=("parallel", "parallel")),
    )(x4f, x2g, x0g,
      kp["w1"], kp["b1"], kp["w2a"], kp["w2b"], kp["b2"],
      kp["w3a4"], kp["w3b4"], kp["b3t"], kp["w4seg"], kp["b4"])

    # ---- un-permute the grouped per-pixel scalars; final nearest 2x upsample
    t = out_pk.reshape(N, H, W, 2, 2, 2, 2)            # n pi pj si sj ui uj
    t = jnp.transpose(t, (0, 1, 3, 5, 2, 4, 6))        # n pi si ui pj sj uj
    m2map = t.reshape(N, 4 * H, 4 * W)
    out = jnp.repeat(jnp.repeat(m2map, 2, axis=1), 2, axis=2)
    return out[:, None, :, :]                          # (N, 1, 8H, 8W)


# ----------------------------------------------------------------------------
# Pure-JAX reference of the ORIGINAL (un-commuted) module for a sanity check.
# ----------------------------------------------------------------------------
def seg_reference(x4, x2, x0, params):
    (w1, s1, b1), (w2, s2, b2), (w3, s3, b3), (w4, s4, b4) = params

    def cbs(x, w, s, b):  # 1x1 conv + folded BN + SiLU (NHWC)
        y = jnp.einsum("nhwc,cd->nhwd", x, w,
                       preferred_element_type=jnp.float32) * s + b
        return y * jax.nn.sigmoid(y)

    def up2x(x):          # nearest-neighbor 2x (NHWC)
        return jnp.repeat(jnp.repeat(x, 2, axis=1), 2, axis=2)

    x4 = jnp.transpose(x4, (0, 2, 3, 1))
    x2 = jnp.transpose(x2, (0, 2, 3, 1))
    x0 = jnp.transpose(x0, (0, 2, 3, 1))
    out = cbs(up2x(x4), w1, s1, b1)
    out = jnp.concatenate([out, x2], axis=-1)
    out = cbs(up2x(out), w2, s2, b2)
    out = jnp.concatenate([out, x0], axis=-1)
    out = cbs(up2x(out), w3, s3, b3)
    out = cbs(out, w4, s4, b4)
    return jnp.transpose(out, (0, 3, 1, 2))


if __name__ == "__main__":
    key = jax.random.PRNGKey(0)
    k_in4, k_in2, k_in0, k1, k2, k3, k4 = jax.random.split(key, 7)

    N, H, W = 2, 4, 4
    x4 = jax.random.normal(k_in4, (N, 256, H, W), jnp.float32)          # coarsest
    x2 = jax.random.normal(k_in2, (N, 128, 2 * H, 2 * W), jnp.float32)
    x0 = jax.random.normal(k_in0, (N, 64, 4 * H, 4 * W), jnp.float32)   # finest

    params = (
        make_conv_bn_params(k1, 256, 128),   # conv1
        make_conv_bn_params(k2, 256, 64),    # conv2
        make_conv_bn_params(k3, 128, 16),    # conv3
        make_conv_bn_params(k4, 16, 1),      # conv4
    )
    kp = prepare_kernel_params(params)

    out = seg_forward(x4, x2, x0, kp)
    jax.block_until_ready(out)
    assert out.shape == (N, 1, 8 * H, 8 * W), out.shape

    # bf16 MXU operands (f32 accumulate) + approx reciprocal => ~1% level error.
    ref = seg_reference(x4, x2, x0, params)
    np.testing.assert_allclose(np.asarray(out), np.asarray(ref),
                               rtol=5e-2, atol=5e-2)

    print("KERNEL_OK")
</pallas_src>

<mosaic_0001>
module attributes {stable_mosaic.version = 11 : i64} {
  func.func @_seg_head_kernel(%arg0: i32, %arg1: i32, %arg2: memref<1x16x256xbf16, #tpu.memory_space<vmem>>, %arg3: memref<1x4x16x128xbf16, #tpu.memory_space<vmem>>, %arg4: memref<1x4x16x256xbf16, #tpu.memory_space<vmem>>, %arg5: memref<256x128xbf16, #tpu.memory_space<vmem>>, %arg6: memref<1x128xf32, #tpu.memory_space<vmem>>, %arg7: memref<128x64xbf16, #tpu.memory_space<vmem>>, %arg8: memref<128x64xbf16, #tpu.memory_space<vmem>>, %arg9: memref<1x64xf32, #tpu.memory_space<vmem>>, %arg10: memref<64x64xbf16, #tpu.memory_space<vmem>>, %arg11: memref<256x64xbf16, #tpu.memory_space<vmem>>, %arg12: memref<1x64xf32, #tpu.memory_space<vmem>>, %arg13: memref<64x4xbf16, #tpu.memory_space<vmem>>, %arg14: memref<1x1xf32, #tpu.memory_space<vmem>>, %arg15: memref<1x16x16xf32, #tpu.memory_space<vmem>>) attributes {dimension_semantics = [#tpu.dimension_semantics<parallel>, #tpu.dimension_semantics<parallel>], iteration_bounds = array<i64: 2, 1>, scalar_prefetch = 0 : i64, scratch_operands = 0 : i64, tpu.core_type = #tpu.core_type<tc>, window_params = [{transform_indices = @transform_0, window_bounds = array<i64: 1, 16, 256>}, {transform_indices = @transform_1, window_bounds = array<i64: 1, 4, 16, 128>}, {transform_indices = @transform_2, window_bounds = array<i64: 1, 4, 16, 256>}, {pipeline_mode = #tpu.pipeline_mode<synchronous>, transform_indices = @transform_3, window_bounds = array<i64: 256, 128>}, {pipeline_mode = #tpu.pipeline_mode<synchronous>, transform_indices = @transform_4, window_bounds = array<i64: 1, 128>}, {pipeline_mode = #tpu.pipeline_mode<synchronous>, transform_indices = @transform_5, window_bounds = array<i64: 128, 64>}, {pipeline_mode = #tpu.pipeline_mode<synchronous>, transform_indices = @transform_6, window_bounds = array<i64: 128, 64>}, {pipeline_mode = #tpu.pipeline_mode<synchronous>, transform_indices = @transform_7, window_bounds = array<i64: 1, 64>}, {pipeline_mode = #tpu.pipeline_mode<synchronous>, transform_indices = @transform_8, window_bounds = array<i64: 64, 64>}, {pipeline_mode = #tpu.pipeline_mode<synchronous>, transform_indices = @transform_9, window_bounds = array<i64: 256, 64>}, {pipeline_mode = #tpu.pipeline_mode<synchronous>, transform_indices = @transform_10, window_bounds = array<i64: 1, 64>}, {pipeline_mode = #tpu.pipeline_mode<synchronous>, transform_indices = @transform_11, window_bounds = array<i64: 64, 4>}, {pipeline_mode = #tpu.pipeline_mode<synchronous>, transform_indices = @transform_12, window_bounds = array<i64: 1, 1>}, {transform_indices = @transform_13, window_bounds = array<i64: 1, 16, 16>}]} {
    %c0 = arith.constant 0 : index
    %c0_0 = arith.constant 0 : index
    %c0_1 = arith.constant 0 : index
    %0 = vector.load %arg2[%c0, %c0_0, %c0_1] : memref<1x16x256xbf16, #tpu.memory_space<vmem>>, vector<1x16x256xbf16>
    %1 = vector.shape_cast %0 : vector<1x16x256xbf16> to vector<16x256xbf16>
    %c0_2 = arith.constant 0 : index
    %c0_3 = arith.constant 0 : index
    %2 = vector.load %arg5[%c0_2, %c0_3] : memref<256x128xbf16, #tpu.memory_space<vmem>>, vector<256x128xbf16>
    %cst = arith.constant dense<0.000000e+00> : vector<16x128xf32>
    %3 = tpu.matmul %1, %2, %cst {dimension_numbers = #tpu.dot_dimension_numbers<[1], [0], [0], [1], [0, 0, 1, 1], [], []>} : vector<16x256xbf16>, vector<256x128xbf16>, vector<16x128xf32> -> vector<16x128xf32>
    %c0_4 = arith.constant 0 : index
    %c0_5 = arith.constant 0 : index
    %4 = vector.load %arg6[%c0_4, %c0_5] : memref<1x128xf32, #tpu.memory_space<vmem>>, vector<1x128xf32>
    %5 = vector.broadcast %4 : vector<1x128xf32> to vector<16x128xf32>
    %6 = arith.addf %3, %5 : vector<16x128xf32>
    %cst_6 = arith.constant 0.000000e+00 : f32
    %7 = vector.broadcast %cst_6 : f32 to vector<16x128xf32>
    %8 = arith.subf %7, %6 : vector<16x128xf32>
    %9 = math.exp %8 : vector<16x128xf32>
    %cst_7 = arith.constant 1.000000e+00 : f32
    %10 = vector.broadcast %cst_7 : f32 to vector<16x128xf32>
    %11 = arith.addf %10, %9 : vector<16x128xf32>
    %12 = tpu.reciprocal %11 {approx = true} : vector<16x128xf32> -> vector<16x128xf32>
    %13 = arith.mulf %6, %12 : vector<16x128xf32>
    %14 = arith.truncf %13 : vector<16x128xf32> to vector<16x128xbf16>
    %c0_8 = arith.constant 0 : index
    %c0_9 = arith.constant 0 : index
    %15 = vector.load %arg7[%c0_8, %c0_9] : memref<128x64xbf16, #tpu.memory_space<vmem>>, vector<128x64xbf16>
    %cst_10 = arith.constant dense<0.000000e+00> : vector<16x64xf32>
    %16 = tpu.matmul %14, %15, %cst_10 {dimension_numbers = #tpu.dot_dimension_numbers<[1], [0], [0], [1], [0, 0, 1, 1], [], []>} : vector<16x128xbf16>, vector<128x64xbf16>, vector<16x64xf32> -> vector<16x64xf32>
    %c0_11 = arith.constant 0 : index
    %c0_12 = arith.constant 0 : index
    %c0_13 = arith.constant 0 : index
    %c0_14 = arith.constant 0 : index
    %17 = vector.load %arg3[%c0_11, %c0_12, %c0_13, %c0_14] : memref<1x4x16x128xbf16, #tpu.memory_space<vmem>>, vector<1x1x16x128xbf16>
    %18 = vector.shape_cast %17 : vector<1x1x16x128xbf16> to vector<16x128xbf16>
    %c0_15 = arith.constant 0 : index
    %c0_16 = arith.constant 0 : index
    %19 = vector.load %arg8[%c0_15, %c0_16] : memref<128x64xbf16, #tpu.memory_space<vmem>>, vector<128x64xbf16>
    %cst_17 = arith.constant dense<0.000000e+00> : vector<16x64xf32>
    %20 = tpu.matmul %18, %19, %cst_17 {dimension_numbers = #tpu.dot_dimension_numbers<[1], [0], [0], [1], [0, 0, 1, 1], [], []>} : vector<16x128xbf16>, vector<128x64xbf16>, vector<16x64xf32> -> vector<16x64xf32>
    %21 = arith.addf %16, %20 : vector<16x64xf32>
    %c0_18 = arith.constant 0 : index
    %c0_19 = arith.constant 0 : index
    %22 = vector.load %arg9[%c0_18, %c0_19] : memref<1x64xf32, #tpu.memory_space<vmem>>, vector<1x64xf32>
    %23 = vector.broadcast %22 : vector<1x64xf32> to vector<16x64xf32>
    %24 = arith.addf %21, %23 : vector<16x64xf32>
    %cst_20 = arith.constant 0.000000e+00 : f32
    %25 = vector.broadcast %cst_20 : f32 to vector<16x64xf32>
    %26 = arith.subf %25, %24 : vector<16x64xf32>
    %27 = math.exp %26 : vector<16x64xf32>
    %cst_21 = arith.constant 1.000000e+00 : f32
    %28 = vector.broadcast %cst_21 : f32 to vector<16x64xf32>
    %29 = arith.addf %28, %27 : vector<16x64xf32>
    %30 = tpu.reciprocal %29 {approx = true} : vector<16x64xf32> -> vector<16x64xf32>
    %31 = arith.mulf %24, %30 : vector<16x64xf32>
    %32 = arith.truncf %31 : vector<16x64xf32> to vector<16x64xbf16>
    %c0_22 = arith.constant 0 : index
    %c0_23 = arith.constant 0 : index
    %33 = vector.load %arg10[%c0_22, %c0_23] : memref<64x64xbf16, #tpu.memory_space<vmem>>, vector<64x64xbf16>
    %cst_24 = arith.constant dense<0.000000e+00> : vector<16x64xf32>
    %34 = tpu.matmul %32, %33, %cst_24 {dimension_numbers = #tpu.dot_dimension_numbers<[1], [0], [0], [1], [0, 0, 1, 1], [], []>} : vector<16x64xbf16>, vector<64x64xbf16>, vector<16x64xf32> -> vector<16x64xf32>
    %c0_25 = arith.constant 0 : index
    %c0_26 = arith.constant 0 : index
    %c0_27 = arith.constant 0 : index
    %c0_28 = arith.constant 0 : index
    %35 = vector.load %arg4[%c0_25, %c0_26, %c0_27, %c0_28] : memref<1x4x16x256xbf16, #tpu.memory_space<vmem>>, vector<1x1x16x256xbf16>
    %36 = vector.shape_cast %35 : vector<1x1x16x256xbf16> to vector<16x256xbf16>
    %c0_29 = arith.constant 0 : index
    %c0_30 = arith.constant 0 : index
    %37 = vector.load %arg11[%c0_29, %c0_30] : memref<256x64xbf16, #tpu.memory_space<vmem>>, vector<256x64xbf16>
    %cst_31 = arith.constant dense<0.000000e+00> : vector<16x64xf32>
    %38 = tpu.matmul %36, %37, %cst_31 {dimension_numbers = #tpu.dot_dimension_numbers<[1], [0], [0], [1], [0, 0, 1, 1], [], []>} : vector<16x256xbf16>, vector<256x64xbf16>, vector<16x64xf32> -> vector<16x64xf32>
    %39 = arith.addf %34, %38 : vector<16x64xf32>
    %c0_32 = arith.constant 0 : index
    %c0_33 = arith.constant 0 : index
    %40 = vector.load %arg12[%c0_32, %c0_33] : memref<1x64xf32, #tpu.memory_space<vmem>>, vector<1x64xf32>
    %41 = vector.broadcast %40 : vector<1x64xf32> to vector<16x64xf32>
    %42 = arith.addf %39, %41 : vector<16x64xf32>
    %cst_34 = arith.constant 0.000000e+00 : f32
    %43 = vector.broadcast %cst_34 : f32 to vector<16x64xf32>
    %44 = arith.subf %43, %42 : vector<16x64xf32>
    %45 = math.exp %44 : vector<16x64xf32>
    %cst_35 = arith.constant 1.000000e+00 : f32
    %46 = vector.broadcast %cst_35 : f32 to vector<16x64xf32>
    %47 = arith.addf %46, %45 : vector<16x64xf32>
    %48 = tpu.reciprocal %47 {approx = true} : vector<16x64xf32> -> vector<16x64xf32>
    %49 = arith.mulf %42, %48 : vector<16x64xf32>
    %50 = arith.truncf %49 : vector<16x64xf32> to vector<16x64xbf16>
    %c0_36 = arith.constant 0 : index
    %c0_37 = arith.constant 0 : index
    %51 = vector.load %arg13[%c0_36, %c0_37] : memref<64x4xbf16, #tpu.memory_space<vmem>>, vector<64x4xbf16>
    %cst_38 = arith.constant dense<0.000000e+00> : vector<16x4xf32>
    %52 = tpu.matmul %50, %51, %cst_38 {dimension_numbers = #tpu.dot_dimension_numbers<[1], [0], [0], [1], [0, 0, 1, 1], [], []>} : vector<16x64xbf16>, vector<64x4xbf16>, vector<16x4xf32> -> vector<16x4xf32>
    %c0_39 = arith.constant 0 : index
    %c0_40 = arith.constant 0 : index
    %53 = vector.load %arg14[%c0_39, %c0_40] : memref<1x1xf32, #tpu.memory_space<vmem>>, vector<1x1xf32>
    %54 = vector.broadcast %53 : vector<1x1xf32> to vector<16x4xf32>
    %55 = arith.addf %52, %54 : vector<16x4xf32>
    %cst_41 = arith.constant 0.000000e+00 : f32
    %56 = vector.broadcast %cst_41 : f32 to vector<16x4xf32>
    %57 = arith.subf %56, %55 : vector<16x4xf32>
    %58 = math.exp %57 : vector<16x4xf32>
    %cst_42 = arith.constant 1.000000e+00 : f32
    %59 = vector.broadcast %cst_42 : f32 to vector<16x4xf32>
    %60 = arith.addf %59, %58 : vector<16x4xf32>
    %61 = tpu.reciprocal %60 {approx = true} : vector<16x4xf32> -> vector<16x4xf32>
    %62 = arith.mulf %55, %61 : vector<16x4xf32>
    %c0_43 = arith.constant 0 : index
    %c1 = arith.constant 1 : index
    %c0_44 = arith.constant 0 : index
    %c0_45 = arith.constant 0 : index
    %63 = vector.load %arg3[%c0_43, %c1, %c0_44, %c0_45] : memref<1x4x16x128xbf16, #tpu.memory_space<vmem>>, vector<1x1x16x128xbf16>
    %64 = vector.shape_cast %63 : vector<1x1x16x128xbf16> to vector<16x128xbf16>
    %c0_46 = arith.constant 0 : index
    %c0_47 = arith.constant 0 : index
    %65 = vector.load %arg8[%c0_46, %c0_47] : memref<128x64xbf16, #tpu.memory_space<vmem>>, vector<128x64xbf16>
    %cst_48 = arith.constant dense<0.000000e+00> : vector<16x64xf32>
    %66 = tpu.matmul %64, %65, %cst_48 {dimension_numbers = #tpu.dot_dimension_numbers<[1], [0], [0], [1], [0, 0, 1, 1], [], []>} : vector<16x128xbf16>, vector<128x64xbf16>, vector<16x64xf32> -> vector<16x64xf32>
    %67 = arith.addf %16, %66 : vector<16x64xf32>
    %c0_49 = arith.constant 0 : index
    %c0_50 = arith.constant 0 : index
    %68 = vector.load %arg9[%c0_49, %c0_50] : memref<1x64xf32, #tpu.memory_space<vmem>>, vector<1x64xf32>
    %69 = vector.broadcast %68 : vector<1x64xf32> to vector<16x64xf32>
    %70 = arith.addf %67, %69 : vector<16x64xf32>
    %cst_51 = arith.constant 0.000000e+00 : f32
    %71 = vector.broadcast %cst_51 : f32 to vector<16x64xf32>
    %72 = arith.subf %71, %70 : vector<16x64xf32>
    %73 = math.exp %72 : vector<16x64xf32>
    %cst_52 = arith.constant 1.000000e+00 : f32
    %74 = vector.broadcast %cst_52 : f32 to vector<16x64xf32>
    %75 = arith.addf %74, %73 : vector<16x64xf32>
    %76 = tpu.reciprocal %75 {approx = true} : vector<16x64xf32> -> vector<16x64xf32>
    %77 = arith.mulf %70, %76 : vector<16x64xf32>
    %78 = arith.truncf %77 : vector<16x64xf32> to vector<16x64xbf16>
    %c0_53 = arith.constant 0 : index
    %c0_54 = arith.constant 0 : index
    %79 = vector.load %arg10[%c0_53, %c0_54] : memref<64x64xbf16, #tpu.memory_space<vmem>>, vector<64x64xbf16>
    %cst_55 = arith.constant dense<0.000000e+00> : vector<16x64xf32>
    %80 = tpu.matmul %78, %79, %cst_55 {dimension_numbers = #tpu.dot_dimension_numbers<[1], [0], [0], [1], [0, 0, 1, 1], [], []>} : vector<16x64xbf16>, vector<64x64xbf16>, vector<16x64xf32> -> vector<16x64xf32>
    %c0_56 = arith.constant 0 : index
    %c1_57 = arith.constant 1 : index
    %c0_58 = arith.constant 0 : index
    %c0_59 = arith.constant 0 : index
    %81 = vector.load %arg4[%c0_56, %c1_57, %c0_58, %c0_59] : memref<1x4x16x256xbf16, #tpu.memory_space<vmem>>, vector<1x1x16x256xbf16>
    %82 = vector.shape_cast %81 : vector<1x1x16x256xbf16> to vector<16x256xbf16>
    %c0_60 = arith.constant 0 : index
    %c0_61 = arith.constant 0 : index
    %83 = vector.load %arg11[%c0_60, %c0_61] : memref<256x64xbf16, #tpu.memory_space<vmem>>, vector<256x64xbf16>
    %cst_62 = arith.constant dense<0.000000e+00> : vector<16x64xf32>
    %84 = tpu.matmul %82, %83, %cst_62 {dimension_numbers = #tpu.dot_dimension_numbers<[1], [0], [0], [1], [0, 0, 1, 1], [], []>} : vector<16x256xbf16>, vector<256x64xbf16>, vector<16x64xf32> -> vector<16x64xf32>
    %85 = arith.addf %80, %84 : vector<16x64xf32>
    %c0_63 = arith.constant 0 : index
    %c0_64 = arith.constant 0 : index
    %86 = vector.load %arg12[%c0_63, %c0_64] : memref<1x64xf32, #tpu.memory_space<vmem>>, vector<1x64xf32>
    %87 = vector.broadcast %86 : vector<1x64xf32> to vector<16x64xf32>
    %88 = arith.addf %85, %87 : vector<16x64xf32>
    %cst_65 = arith.constant 0.000000e+00 : f32
    %89 = vector.broadcast %cst_65 : f32 to vector<16x64xf32>
    %90 = arith.subf %89, %88 : vector<16x64xf32>
    %91 = math.exp %90 : vector<16x64xf32>
    %cst_66 = arith.constant 1.000000e+00 : f32
    %92 = vector.broadcast %cst_66 : f32 to vector<16x64xf32>
    %93 = arith.addf %92, %91 : vector<16x64xf32>
    %94 = tpu.reciprocal %93 {approx = true} : vector<16x64xf32> -> vector<16x64xf32>
    %95 = arith.mulf %88, %94 : vector<16x64xf32>
    %96 = arith.truncf %95 : vector<16x64xf32> to vector<16x64xbf16>
    %c0_67 = arith.constant 0 : index
    %c0_68 = arith.constant 0 : index
    %97 = vector.load %arg13[%c0_67, %c0_68] : memref<64x4xbf16, #tpu.memory_space<vmem>>, vector<64x4xbf16>
    %cst_69 = arith.constant dense<0.000000e+00> : vector<16x4xf32>
    %98 = tpu.matmul %96, %97, %cst_69 {dimension_numbers = #tpu.dot_dimension_numbers<[1], [0], [0], [1], [0, 0, 1, 1], [], []>} : vector<16x64xbf16>, vector<64x4xbf16>, vector<16x4xf32> -> vector<16x4xf32>
    %c0_70 = arith.constant 0 : index
    %c0_71 = arith.constant 0 : index
    %99 = vector.load %arg14[%c0_70, %c0_71] : memref<1x1xf32, #tpu.memory_space<vmem>>, vector<1x1xf32>
    %100 = vector.broadcast %99 : vector<1x1xf32> to vector<16x4xf32>
    %101 = arith.addf %98, %100 : vector<16x4xf32>
    %cst_72 = arith.constant 0.000000e+00 : f32
    %102 = vector.broadcast %cst_72 : f32 to vector<16x4xf32>
    %103 = arith.subf %102, %101 : vector<16x4xf32>
    %104 = math.exp %103 : vector<16x4xf32>
    %cst_73 = arith.constant 1.000000e+00 : f32
    %105 = vector.broadcast %cst_73 : f32 to vector<16x4xf32>
    %106 = arith.addf %105, %104 : vector<16x4xf32>
    %107 = tpu.reciprocal %106 {approx = true} : vector<16x4xf32> -> vector<16x4xf32>
    %108 = arith.mulf %101, %107 : vector<16x4xf32>
    %c0_74 = arith.constant 0 : index
    %c2 = arith.constant 2 : index
    %c0_75 = arith.constant 0 : index
    %c0_76 = arith.constant 0 : index
    %109 = vector.load %arg3[%c0_74, %c2, %c0_75, %c0_76] : memref<1x4x16x128xbf16, #tpu.memory_space<vmem>>, vector<1x1x16x128xbf16>
    %110 = vector.shape_cast %109 : vector<1x1x16x128xbf16> to vector<16x128xbf16>
    %c0_77 = arith.constant 0 : index
    %c0_78 = arith.constant 0 : index
    %111 = vector.load %arg8[%c0_77, %c0_78] : memref<128x64xbf16, #tpu.memory_space<vmem>>, vector<128x64xbf16>
    %cst_79 = arith.constant dense<0.000000e+00> : vector<16x64xf32>
    %112 = tpu.matmul %110, %111, %cst_79 {dimension_numbers = #tpu.dot_dimension_numbers<[1], [0], [0], [1], [0, 0, 1, 1], [], []>} : vector<16x128xbf16>, vector<128x64xbf16>, vector<16x64xf32> -> vector<16x64xf32>
    %113 = arith.addf %16, %112 : vector<16x64xf32>
    %c0_80 = arith.constant 0 : index
    %c0_81 = arith.constant 0 : index
    %114 = vector.load %arg9[%c0_80, %c0_81] : memref<1x64xf32, #tpu.memory_space<vmem>>, vector<1x64xf32>
    %115 = vector.broadcast %114 : vector<1x64xf32> to vector<16x64xf32>
    %116 = arith.addf %113, %115 : vector<16x64xf32>
    %cst_82 = arith.constant 0.000000e+00 : f32
    %117 = vector.broadcast %cst_82 : f32 to vector<16x64xf32>
    %118 = arith.subf %117, %116 : vector<16x64xf32>
    %119 = math.exp %118 : vector<16x64xf32>
    %cst_83 = arith.constant 1.000000e+00 : f32
    %120 = vector.broadcast %cst_83 : f32 to vector<16x64xf32>
    %121 = arith.addf %120, %119 : vector<16x64xf32>
    %122 = tpu.reciprocal %121 {approx = true} : vector<16x64xf32> -> vector<16x64xf32>
    %123 = arith.mulf %116, %122 : vector<16x64xf32>
    %124 = arith.truncf %123 : vector<16x64xf32> to vector<16x64xbf16>
    %c0_84 = arith.constant 0 : index
    %c0_85 = arith.constant 0 : index
    %125 = vector.load %arg10[%c0_84, %c0_85] : memref<64x64xbf16, #tpu.memory_space<vmem>>, vector<64x64xbf16>
    %cst_86 = arith.constant dense<0.000000e+00> : vector<16x64xf32>
    %126 = tpu.matmul %124, %125, %cst_86 {dimension_numbers = #tpu.dot_dimension_numbers<[1], [0], [0], [1], [0, 0, 1, 1], [], []>} : vector<16x64xbf16>, vector<64x64xbf16>, vector<16x64xf32> -> vector<16x64xf32>
    %c0_87 = arith.constant 0 : index
    %c2_88 = arith.constant 2 : index
    %c0_89 = arith.constant 0 : index
    %c0_90 = arith.constant 0 : index
    %127 = vector.load %arg4[%c0_87, %c2_88, %c0_89, %c0_90] : memref<1x4x16x256xbf16, #tpu.memory_space<vmem>>, vector<1x1x16x256xbf16>
    %128 = vector.shape_cast %127 : vector<1x1x16x256xbf16> to vector<16x256xbf16>
    %c0_91 = arith.constant 0 : index
    %c0_92 = arith.constant 0 : index
    %129 = vector.load %arg11[%c0_91, %c0_92] : memref<256x64xbf16, #tpu.memory_space<vmem>>, vector<256x64xbf16>
    %cst_93 = arith.constant dense<0.000000e+00> : vector<16x64xf32>
    %130 = tpu.matmul %128, %129, %cst_93 {dimension_numbers = #tpu.dot_dimension_numbers<[1], [0], [0], [1], [0, 0, 1, 1], [], []>} : vector<16x256xbf16>, vector<256x64xbf16>, vector<16x64xf32> -> vector<16x64xf32>
    %131 = arith.addf %126, %130 : vector<16x64xf32>
    %c0_94 = arith.constant 0 : index
    %c0_95 = arith.constant 0 : index
    %132 = vector.load %arg12[%c0_94, %c0_95] : memref<1x64xf32, #tpu.memory_space<vmem>>, vector<1x64xf32>
    %133 = vector.broadcast %132 : vector<1x64xf32> to vector<16x64xf32>
    %134 = arith.addf %131, %133 : vector<16x64xf32>
    %cst_96 = arith.constant 0.000000e+00 : f32
    %135 = vector.broadcast %cst_96 : f32 to vector<16x64xf32>
    %136 = arith.subf %135, %134 : vector<16x64xf32>
    %137 = math.exp %136 : vector<16x64xf32>
    %cst_97 = arith.constant 1.000000e+00 : f32
    %138 = vector.broadcast %cst_97 : f32 to vector<16x64xf32>
    %139 = arith.addf %138, %137 : vector<16x64xf32>
    %140 = tpu.reciprocal %139 {approx = true} : vector<16x64xf32> -> vector<16x64xf32>
    %141 = arith.mulf %134, %140 : vector<16x64xf32>
    %142 = arith.truncf %141 : vector<16x64xf32> to vector<16x64xbf16>
    %c0_98 = arith.constant 0 : index
    %c0_99 = arith.constant 0 : index
    %143 = vector.load %arg13[%c0_98, %c0_99] : memref<64x4xbf16, #tpu.memory_space<vmem>>, vector<64x4xbf16>
    %cst_100 = arith.constant dense<0.000000e+00> : vector<16x4xf32>
    %144 = tpu.matmul %142, %143, %cst_100 {dimension_numbers = #tpu.dot_dimension_numbers<[1], [0], [0], [1], [0, 0, 1, 1], [], []>} : vector<16x64xbf16>, vector<64x4xbf16>, vector<16x4xf32> -> vector<16x4xf32>
    %c0_101 = arith.constant 0 : index
    %c0_102 = arith.constant 0 : index
    %145 = vector.load %arg14[%c0_101, %c0_102] : memref<1x1xf32, #tpu.memory_space<vmem>>, vector<1x1xf32>
    %146 = vector.broadcast %145 : vector<1x1xf32> to vector<16x4xf32>
    %147 = arith.addf %144, %146 : vector<16x4xf32>
    %cst_103 = arith.constant 0.000000e+00 : f32
    %148 = vector.broadcast %cst_103 : f32 to vector<16x4xf32>
    %149 = arith.subf %148, %147 : vector<16x4xf32>
    %150 = math.exp %149 : vector<16x4xf32>
    %cst_104 = arith.constant 1.000000e+00 : f32
    %151 = vector.broadcast %cst_104 : f32 to vector<16x4xf32>
    %152 = arith.addf %151, %150 : vector<16x4xf32>
    %153 = tpu.reciprocal %152 {approx = true} : vector<16x4xf32> -> vector<16x4xf32>
    %154 = arith.mulf %147, %153 : vector<16x4xf32>
    %c0_105 = arith.constant 0 : index
    %c3 = arith.constant 3 : index
    %c0_106 = arith.constant 0 : index
    %c0_107 = arith.constant 0 : index
    %155 = vector.load %arg3[%c0_105, %c3, %c0_106, %c0_107] : memref<1x4x16x128xbf16, #tpu.memory_space<vmem>>, vector<1x1x16x128xbf16>
    %156 = vector.shape_cast %155 : vector<1x1x16x128xbf16> to vector<16x128xbf16>
    %c0_108 = arith.constant 0 : index
    %c0_109 = arith.constant 0 : index
    %157 = vector.load %arg8[%c0_108, %c0_109] : memref<128x64xbf16, #tpu.memory_space<vmem>>, vector<128x64xbf16>
    %cst_110 = arith.constant dense<0.000000e+00> : vector<16x64xf32>
    %158 = tpu.matmul %156, %157, %cst_110 {dimension_numbers = #tpu.dot_dimension_numbers<[1], [0], [0], [1], [0, 0, 1, 1], [], []>} : vector<16x128xbf16>, vector<128x64xbf16>, vector<16x64xf32> -> vector<16x64xf32>
    %159 = arith.addf %16, %158 : vector<16x64xf32>
    %c0_111 = arith.constant 0 : index
    %c0_112 = arith.constant 0 : index
    %160 = vector.load %arg9[%c0_111, %c0_112] : memref<1x64xf32, #tpu.memory_space<vmem>>, vector<1x64xf32>
    %161 = vector.broadcast %160 : vector<1x64xf32> to vector<16x64xf32>
    %162 = arith.addf %159, %161 : vector<16x64xf32>
    %cst_113 = arith.constant 0.000000e+00 : f32
    %163 = vector.broadcast %cst_113 : f32 to vector<16x64xf32>
    %164 = arith.subf %163, %162 : vector<16x64xf32>
    %165 = math.exp %164 : vector<16x64xf32>
    %cst_114 = arith.constant 1.000000e+00 : f32
    %166 = vector.broadcast %cst_114 : f32 to vector<16x64xf32>
    %167 = arith.addf %166, %165 : vector<16x64xf32>
    %168 = tpu.reciprocal %167 {approx = true} : vector<16x64xf32> -> vector<16x64xf32>
    %169 = arith.mulf %162, %168 : vector<16x64xf32>
    %170 = arith.truncf %169 : vector<16x64xf32> to vector<16x64xbf16>
    %c0_115 = arith.constant 0 : index
    %c0_116 = arith.constant 0 : index
    %171 = vector.load %arg10[%c0_115, %c0_116] : memref<64x64xbf16, #tpu.memory_space<vmem>>, vector<64x64xbf16>
    %cst_117 = arith.constant dense<0.000000e+00> : vector<16x64xf32>
    %172 = tpu.matmul %170, %171, %cst_117 {dimension_numbers = #tpu.dot_dimension_numbers<[1], [0], [0], [1], [0, 0, 1, 1], [], []>} : vector<16x64xbf16>, vector<64x64xbf16>, vector<16x64xf32> -> vector<16x64xf32>
    %c0_118 = arith.constant 0 : index
    %c3_119 = arith.constant 3 : index
    %c0_120 = arith.constant 0 : index
    %c0_121 = arith.constant 0 : index
    %173 = vector.load %arg4[%c0_118, %c3_119, %c0_120, %c0_121] : memref<1x4x16x256xbf16, #tpu.memory_space<vmem>>, vector<1x1x16x256xbf16>
    %174 = vector.shape_cast %173 : vector<1x1x16x256xbf16> to vector<16x256xbf16>
    %c0_122 = arith.constant 0 : index
    %c0_123 = arith.constant 0 : index
    %175 = vector.load %arg11[%c0_122, %c0_123] : memref<256x64xbf16, #tpu.memory_space<vmem>>, vector<256x64xbf16>
    %cst_124 = arith.constant dense<0.000000e+00> : vector<16x64xf32>
    %176 = tpu.matmul %174, %175, %cst_124 {dimension_numbers = #tpu.dot_dimension_numbers<[1], [0], [0], [1], [0, 0, 1, 1], [], []>} : vector<16x256xbf16>, vector<256x64xbf16>, vector<16x64xf32> -> vector<16x64xf32>
    %177 = arith.addf %172, %176 : vector<16x64xf32>
    %c0_125 = arith.constant 0 : index
    %c0_126 = arith.constant 0 : index
    %178 = vector.load %arg12[%c0_125, %c0_126] : memref<1x64xf32, #tpu.memory_space<vmem>>, vector<1x64xf32>
    %179 = vector.broadcast %178 : vector<1x64xf32> to vector<16x64xf32>
    %180 = arith.addf %177, %179 : vector<16x64xf32>
    %cst_127 = arith.constant 0.000000e+00 : f32
    %181 = vector.broadcast %cst_127 : f32 to vector<16x64xf32>
    %182 = arith.subf %181, %180 : vector<16x64xf32>
    %183 = math.exp %182 : vector<16x64xf32>
    %cst_128 = arith.constant 1.000000e+00 : f32
    %184 = vector.broadcast %cst_128 : f32 to vector<16x64xf32>
    %185 = arith.addf %184, %183 : vector<16x64xf32>
    %186 = tpu.reciprocal %185 {approx = true} : vector<16x64xf32> -> vector<16x64xf32>
    %187 = arith.mulf %180, %186 : vector<16x64xf32>
    %188 = arith.truncf %187 : vector<16x64xf32> to vector<16x64xbf16>
    %c0_129 = arith.constant 0 : index
    %c0_130 = arith.constant 0 : index
    %189 = vector.load %arg13[%c0_129, %c0_130] : memref<64x4xbf16, #tpu.memory_space<vmem>>, vector<64x4xbf16>
    %cst_131 = arith.constant dense<0.000000e+00> : vector<16x4xf32>
    %190 = tpu.matmul %188, %189, %cst_131 {dimension_numbers = #tpu.dot_dimension_numbers<[1], [0], [0], [1], [0, 0, 1, 1], [], []>} : vector<16x64xbf16>, vector<64x4xbf16>, vector<16x4xf32> -> vector<16x4xf32>
    %c0_132 = arith.constant 0 : index
    %c0_133 = arith.constant 0 : index
    %191 = vector.load %arg14[%c0_132, %c0_133] : memref<1x1xf32, #tpu.memory_space<vmem>>, vector<1x1xf32>
    %192 = vector.broadcast %191 : vector<1x1xf32> to vector<16x4xf32>
    %193 = arith.addf %190, %192 : vector<16x4xf32>
    %cst_134 = arith.constant 0.000000e+00 : f32
    %194 = vector.broadcast %cst_134 : f32 to vector<16x4xf32>
    %195 = arith.subf %194, %193 : vector<16x4xf32>
    %196 = math.exp %195 : vector<16x4xf32>
    %cst_135 = arith.constant 1.000000e+00 : f32
    %197 = vector.broadcast %cst_135 : f32 to vector<16x4xf32>
    %198 = arith.addf %197, %196 : vector<16x4xf32>
    %199 = tpu.reciprocal %198 {approx = true} : vector<16x4xf32> -> vector<16x4xf32>
    %200 = arith.mulf %193, %199 : vector<16x4xf32>
    %201 = tpu.concatenate %62, %108, %154, %200 in 1 : vector<16x4xf32>, vector<16x4xf32>, vector<16x4xf32>, vector<16x4xf32> -> vector<16x16xf32>
    %c0_136 = arith.constant 0 : index
    %c0_137 = arith.constant 0 : index
    %c0_138 = arith.constant 0 : index
    %202 = vector.load %arg15[%c0_136, %c0_137, %c0_138] : memref<1x16x16xf32, #tpu.memory_space<vmem>>, vector<1x16x16xf32>
    %203 = vector.shape_cast %202 : vector<1x16x16xf32> to vector<16x16xf32>
    %204 = vector.shape_cast %201 : vector<16x16xf32> to vector<1x16x16xf32>
    tpu.vector_store %arg15[%c0_136, %c0_137, %c0_138], %204 {strides = array<i32>} : memref<1x16x16xf32, #tpu.memory_space<vmem>>, vector<1x16x16xf32>,
    return
  }
  func.func @transform_0(%arg0: i32, %arg1: i32) -> (i32, i32, i32) {
    %c0_i32 = arith.constant 0 : i32
    %c0_i32_0 = arith.constant 0 : i32
    return %arg0, %arg1, %c0_i32 : i32, i32, i32
  }
  func.func @transform_1(%arg0: i32, %arg1: i32) -> (i32, i32, i32, i32) {
    %c0_i32 = arith.constant 0 : i32
    %c0_i32_0 = arith.constant 0 : i32
    %c0_i32_1 = arith.constant 0 : i32
    return %arg0, %c0_i32, %arg1, %c0_i32_0 : i32, i32, i32, i32
  }
  func.func @transform_2(%arg0: i32, %arg1: i32) -> (i32, i32, i32, i32) {
    %c0_i32 = arith.constant 0 : i32
    %c0_i32_0 = arith.constant 0 : i32
    %c0_i32_1 = arith.constant 0 : i32
    return %arg0, %c0_i32, %arg1, %c0_i32_0 : i32, i32, i32, i32
  }
  func.func @transform_3(%arg0: i32, %arg1: i32) -> (i32, i32) {
    %c0_i32 = arith.constant 0 : i32
    %c0_i32_0 = arith.constant 0 : i32
    %c0_i32_1 = arith.constant 0 : i32
    return %c0_i32, %c0_i32_0 : i32, i32
  }
  func.func @transform_4(%arg0: i32, %arg1: i32) -> (i32, i32) {
    %c0_i32 = arith.constant 0 : i32
    %c0_i32_0 = arith.constant 0 : i32
    %c0_i32_1 = arith.constant 0 : i32
    return %c0_i32, %c0_i32_0 : i32, i32
  }
  func.func @transform_5(%arg0: i32, %arg1: i32) -> (i32, i32) {
    %c0_i32 = arith.constant 0 : i32
    %c0_i32_0 = arith.constant 0 : i32
    %c0_i32_1 = arith.constant 0 : i32
    return %c0_i32, %c0_i32_0 : i32, i32
  }
  func.func @transform_6(%arg0: i32, %arg1: i32) -> (i32, i32) {
    %c0_i32 = arith.constant 0 : i32
    %c0_i32_0 = arith.constant 0 : i32
    %c0_i32_1 = arith.constant 0 : i32
    return %c0_i32, %c0_i32_0 : i32, i32
  }
  func.func @transform_7(%arg0: i32, %arg1: i32) -> (i32, i32) {
    %c0_i32 = arith.constant 0 : i32
    %c0_i32_0 = arith.constant 0 : i32
    %c0_i32_1 = arith.constant 0 : i32
    return %c0_i32, %c0_i32_0 : i32, i32
  }
  func.func @transform_8(%arg0: i32, %arg1: i32) -> (i32, i32) {
    %c0_i32 = arith.constant 0 : i32
    %c0_i32_0 = arith.constant 0 : i32
    %c0_i32_1 = arith.constant 0 : i32
    return %c0_i32, %c0_i32_0 : i32, i32
  }
  func.func @transform_9(%arg0: i32, %arg1: i32) -> (i32, i32) {
    %c0_i32 = arith.constant 0 : i32
    %c0_i32_0 = arith.constant 0 : i32
    %c0_i32_1 = arith.constant 0 : i32
    return %c0_i32, %c0_i32_0 : i32, i32
  }
  func.func @transform_10(%arg0: i32, %arg1: i32) -> (i32, i32) {
    %c0_i32 = arith.constant 0 : i32
    %c0_i32_0 = arith.constant 0 : i32
    %c0_i32_1 = arith.constant 0 : i32
    return %c0_i32, %c0_i32_0 : i32, i32
  }
  func.func @transform_11(%arg0: i32, %arg1: i32) -> (i32, i32) {
    %c0_i32 = arith.constant 0 : i32
    %c0_i32_0 = arith.constant 0 : i32
    %c0_i32_1 = arith.constant 0 : i32
    return %c0_i32, %c0_i32_0 : i32, i32
  }
  func.func @transform_12(%arg0: i32, %arg1: i32) -> (i32, i32) {
    %c0_i32 = arith.constant 0 : i32
    %c0_i32_0 = arith.constant 0 : i32
    %c0_i32_1 = arith.constant 0 : i32
    return %c0_i32, %c0_i32_0 : i32, i32
  }
  func.func @transform_13(%arg0: i32, %arg1: i32) -> (i32, i32, i32) {
    %c0_i32 = arith.constant 0 : i32
    %c0_i32_0 = arith.constant 0 : i32
    return %arg0, %arg1, %c0_i32 : i32, i32, i32
  }
}

</mosaic_0001>

<llo_original>
// kernel: seg_forward.1
$region0: #{seg_forward.1}
  #allocation0 [shape = 'u32[]', space=smem, size = 0x4, offset = 0x4, fixed_abs, tag = 'smem constant byte address 0x4 - core index']
  #allocation1 [shape = 'u32[144,128]{1,0:T(1,128)}', space=vmem, size = 0x12000, scoped, tag = 'internal scratch']
  #allocation2 [shape = 'f32[1,1]{1,0:T(1,128)S(1)}', space=vmem, size = 0x200, scoped, tag = 'scoped memory for seg_forward.1']
  %s0 = inlined_call_operand.vmem [shape: bf16[2,16,256], index: 0, kind: input, shape index: {}]
  %s1 = inlined_call_operand.vmem [shape: bf16[2,4,16,128], index: 1, kind: input, shape index: {}]
  %s2 = inlined_call_operand.vmem [shape: bf16[2,4,16,256], index: 2, kind: input, shape index: {}]
  %s3 = inlined_call_operand.vmem [shape: bf16[256,128], index: 3, kind: input, shape index: {}]
  %s4 = inlined_call_operand.vmem [shape: f32[1,128], index: 4, kind: input, shape index: {}]
  %s5 = inlined_call_operand.vmem [shape: bf16[128,64], index: 5, kind: input, shape index: {}]
  %s6 = inlined_call_operand.vmem [shape: bf16[128,64], index: 6, kind: input, shape index: {}]
  %s7 = inlined_call_operand.vmem [shape: f32[1,64], index: 7, kind: input, shape index: {}]
  %s8 = inlined_call_operand.vmem [shape: bf16[64,64], index: 8, kind: input, shape index: {}]
  %s9 = inlined_call_operand.vmem [shape: bf16[256,64], index: 9, kind: input, shape index: {}]
  %s10 = inlined_call_operand.vmem [shape: f32[1,64], index: 10, kind: input, shape index: {}]
  %s11 = inlined_call_operand.vmem [shape: bf16[64,4], index: 11, kind: input, shape index: {}]
  %s12 = inlined_call_operand.<no memory space> [shape: f32[1,1], index: 12, kind: input, shape index: {}]
  %s13 = inlined_call_operand.vmem [shape: f32[2,16,16], index: 13, kind: output, shape index: {}]
  %s14 = sld [smem:[#allocation0]]
  $region85: #{seg_forward.1} parent=0
    _
  %s16 = ssub.s32 1, %s14
  %s17 = scalar_select 0, %s16, %s14
  %v18 = vstv %s12
  %19 = vst [vmem:[#allocation2] sm:$0x1] %v18
  loop: start=0, step=1, limit=4
  $region2: #{seg_forward.1} parent=0 // loop_pre_header
    _
  $region3: #{seg_forward.1} parent=0 // loop_header
    %s21 = sphi 0, %s25
    %p22 = scmp.ge.s32.totalorder %s21, 4
    %s28 = sphi 0, %s40
    %s29 = sphi 0, %s36
    %s30 = sphi 0, %s28
    %s31 = sphi 0, %s29
    %s32 = sphi 0, %s30
    %s33 = sphi 0, %s31
    %s45 = sphi 0, %s47
    %s48 = sphi 0, %s45
    %s49 = sphi 0, %s48
    %s65 = sphi 0, %s49
    %s73 = sphi 0, %s75
    %s76 = sphi 0, %s73
    %s77 = sphi 0, %s76
    %s93 = sphi 0, %s77
    %s101 = sphi 0, %s103
    %s104 = sphi 0, %s101
    %s105 = sphi 0, %s104
    %s121 = sphi 0, %s105
    %s125 = sphi 0, %s125
    %s127 = sphi 0, %s125
    %s128 = sphi 0, %s127
    %s142 = sphi 0, %s128
    %s146 = sphi 0, %s146
    %s148 = sphi 0, %s146
    %s149 = sphi 0, %s148
    %s163 = sphi 0, %s149
    %s167 = sphi 0, %s167
    %s169 = sphi 0, %s167
    %s170 = sphi 0, %s169
    %s184 = sphi 0, %s170
    %s188 = sphi 0, %s188
    %s190 = sphi 0, %s188
    %s191 = sphi 0, %s190
    %s205 = sphi 0, %s191
    %s209 = sphi 0, %s209
    %s211 = sphi 0, %s209
    %s212 = sphi 0, %s211
    %s226 = sphi 0, %s212
    %s230 = sphi 0, %s230
    %s232 = sphi 0, %s230
    %s233 = sphi 0, %s232
    %s247 = sphi 0, %s233
    %s251 = sphi 0, %s251
    %s253 = sphi 0, %s251
    %s254 = sphi 0, %s253
    %s268 = sphi 0, %s254
    %s272 = sphi 0, %s272
    %s274 = sphi 0, %s272
    %s275 = sphi 0, %s274
    %s289 = sphi 0, %s275
    %s293 = sphi 0, %s293
    %s295 = sphi 0, %s293
    %s296 = sphi 0, %s295
    %s310 = sphi 0, %s296
    %s314 = sphi 0, %s314
    %s316 = sphi 0, %s314
    %s317 = sphi 0, %s316
    %s331 = sphi 0, %s317
    %s339 = sphi 0, %s341
    %s342 = sphi 0, %s339
    %s343 = sphi 0, %s342
    %s359 = sphi 0, %s343
  $region4: #{seg_forward.1} parent=0 // loop_header_branch
    %24 = sbr.rel (%p22) target = $region8
  $region5: #{seg_forward.1} parent=0 // loop_body
    %s26 = ssub.s32 %s21, 1
    %s27 = ssub.s32 %s21, 2
    %s34 = sadd.s32 1, %s29
    %p35 = scmp.ge.s32.totalorder %s34, 1
    %s36 = scalar_select %p35, 0, %s34
    %s37 = sadd.s32 1, %s28
    %s38 = scalar_select %p35, %s37, %s28
    %p39 = scmp.ge.s32.totalorder %s38, 2
    %s40 = scalar_select %p39, 0, %s38
    %s41 = ssub.s32 %s28, %s40
    %s42 = ssub.s32 %s29, %s36
    %s43 = sor.u32 %s41, %s42
    %p44 = scmp.eq.s32.totalorder %s43, 0
    %s46 = sadd.s32 %s45, 1
    %s47 = scalar_select %p44, %s45, %s46
    %p50 = pneg %p44
    %p51 = scmp.eq.s32.totalorder %s21, 1
    %p52 = por %p50, %p51
    %p53 = scmp.ne.s32.totalorder %s45, %s48
    %p54 = scmp.eq.s32.totalorder %s21, 0
    %p55 = por %p53, %p54
    %p56 = scmp.ne.s32.totalorder %s45, %s48
    %p57 = scmp.eq.s32.totalorder %s26, 1
    %p58 = por %p56, %p57
    %p59 = scmp.ne.s32.totalorder %s48, %s49
    %p60 = scmp.eq.s32.totalorder %s26, 0
    %p61 = por %p59, %p60
    %p62 = scmp.ne.s32.totalorder %s48, %s49
    %p63 = scmp.eq.s32.totalorder %s27, 1
    %p64 = por %p62, %p63
    %p66 = scmp.ne.s32.totalorder %s49, %s65
    %p67 = scmp.eq.s32.totalorder %s27, 0
    %p68 = por %p66, %p67
    %s69 = ssub.s32 %s28, %s40
    %s70 = ssub.s32 %s29, %s36
    %s71 = sor.u32 %s69, %s70
    %p72 = scmp.eq.s32.totalorder %s71, 0
    %s74 = sadd.s32 %s73, 1
    %s75 = scalar_select %p72, %s73, %s74
    %p78 = pneg %p72
    %p79 = scmp.eq.s32.totalorder %s21, 1
    %p80 = por %p78, %p79
    %p81 = scmp.ne.s32.totalorder %s73, %s76
    %p82 = scmp.eq.s32.totalorder %s21, 0
    %p83 = por %p81, %p82
    %p84 = scmp.ne.s32.totalorder %s73, %s76
    %p85 = scmp.eq.s32.totalorder %s26, 1
    %p86 = por %p84, %p85
    %p87 = scmp.ne.s32.totalorder %s76, %s77
    %p88 = scmp.eq.s32.totalorder %s26, 0
    %p89 = por %p87, %p88
    %p90 = scmp.ne.s32.totalorder %s76, %s77
    %p91 = scmp.eq.s32.totalorder %s27, 1
    %p92 = por %p90, %p91
    %p94 = scmp.ne.s32.totalorder %s77, %s93
    %p95 = scmp.eq.s32.totalorder %s27, 0
    %p96 = por %p94, %p95
    %s97 = ssub.s32 %s28, %s40
    %s98 = ssub.s32 %s29, %s36
    %s99 = sor.u32 %s97, %s98
    %p100 = scmp.eq.s32.totalorder %s99, 0
    %s102 = sadd.s32 %s101, 1
    %s103 = scalar_select %p100, %s101, %s102
    %p106 = pneg %p100
    %p107 = scmp.eq.s32.totalorder %s21, 1
    %p108 = por %p106, %p107
    %p109 = scmp.ne.s32.totalorder %s101, %s104
    %p110 = scmp.eq.s32.totalorder %s21, 0
    %p111 = por %p109, %p110
    %p112 = scmp.ne.s32.totalorder %s101, %s104
    %p113 = scmp.eq.s32.totalorder %s26, 1
    %p114 = por %p112, %p113
    %p115 = scmp.ne.s32.totalorder %s104, %s105
    %p116 = scmp.eq.s32.totalorder %s26, 0
    %p117 = por %p115, %p116
    %p118 = scmp.ne.s32.totalorder %s104, %s105
    %p119 = scmp.eq.s32.totalorder %s27, 1
    %p120 = por %p118, %p119
    %p122 = scmp.ne.s32.totalorder %s105, %s121
    %p123 = scmp.eq.s32.totalorder %s27, 0
    %p124 = por %p122, %p123
    %s126 = sadd.s32 %s125, 1
    %p129 = scmp.eq.s32.totalorder %s21, 1
    %p130 = scmp.ne.s32.totalorder %s125, %s127
    %p131 = scmp.eq.s32.totalorder %s21, 0
    %p132 = por %p130, %p131
    %p133 = scmp.ne.s32.totalorder %s125, %s127
    %p134 = scmp.eq.s32.totalorder %s26, 1
    %p135 = por %p133, %p134
    %p136 = scmp.ne.s32.totalorder %s127, %s128
    %p137 = scmp.eq.s32.totalorder %s26, 0
    %p138 = por %p136, %p137
    %p139 = scmp.ne.s32.totalorder %s127, %s128
    %p140 = scmp.eq.s32.totalorder %s27, 1
    %p141 = por %p139, %p140
    %p143 = scmp.ne.s32.totalorder %s128, %s142
    %p144 = scmp.eq.s32.totalorder %s27, 0
    %p145 = por %p143, %p144
    %s147 = sadd.s32 %s146, 1
    %p150 = scmp.eq.s32.totalorder %s21, 1
    %p151 = scmp.ne.s32.totalorder %s146, %s148
    %p152 = scmp.eq.s32.totalorder %s21, 0
    %p153 = por %p151, %p152
    %p154 = scmp.ne.s32.totalorder %s146, %s148
    %p155 = scmp.eq.s32.totalorder %s26, 1
    %p156 = por %p154, %p155
    %p157 = scmp.ne.s32.totalorder %s148, %s149
    %p158 = scmp.eq.s32.totalorder %s26, 0
    %p159 = por %p157, %p158
    %p160 = scmp.ne.s32.totalorder %s148, %s149
    %p161 = scmp.eq.s32.totalorder %s27, 1
    %p162 = por %p160, %p161
    %p164 = scmp.ne.s32.totalorder %s149, %s163
    %p165 = scmp.eq.s32.totalorder %s27, 0
    %p166 = por %p164, %p165
    %s168 = sadd.s32 %s167, 1
    %p171 = scmp.eq.s32.totalorder %s21, 1
    %p172 = scmp.ne.s32.totalorder %s167, %s169
    %p173 = scmp.eq.s32.totalorder %s21, 0
    %p174 = por %p172, %p173
    %p175 = scmp.ne.s32.totalorder %s167, %s169
    %p176 = scmp.eq.s32.totalorder %s26, 1
    %p177 = por %p175, %p176
    %p178 = scmp.ne.s32.totalorder %s169, %s170
    %p179 = scmp.eq.s32.totalorder %s26, 0
    %p180 = por %p178, %p179
    %p181 = scmp.ne.s32.totalorder %s169, %s170
    %p182 = scmp.eq.s32.totalorder %s27, 1
    %p183 = por %p181, %p182
    %p185 = scmp.ne.s32.totalorder %s170, %s184
    %p186 = scmp.eq.s32.totalorder %s27, 0
    %p187 = por %p185, %p186
    %s189 = sadd.s32 %s188, 1
    %p192 = scmp.eq.s32.totalorder %s21, 1
    %p193 = scmp.ne.s32.totalorder %s188, %s190
    %p194 = scmp.eq.s32.totalorder %s21, 0
    %p195 = por %p193, %p194
    %p196 = scmp.ne.s32.totalorder %s188, %s190
    %p197 = scmp.eq.s32.totalorder %s26, 1
    %p198 = por %p196, %p197
    %p199 = scmp.ne.s32.totalorder %s190, %s191
    %p200 = scmp.eq.s32.totalorder %s26, 0
    %p201 = por %p199, %p200
    %p202 = scmp.ne.s32.totalorder %s190, %s191
    %p203 = scmp.eq.s32.totalorder %s27, 1
    %p204 = por %p202, %p203
    %p206 = scmp.ne.s32.totalorder %s191, %s205
    %p207 = scmp.eq.s32.totalorder %s27, 0
    %p208 = por %p206, %p207
    %s210 = sadd.s32 %s209, 1
    %p213 = scmp.eq.s32.totalorder %s21, 1
    %p214 = scmp.ne.s32.totalorder %s209, %s211
    %p215 = scmp.eq.s32.totalorder %s21, 0
    %p216 = por %p214, %p215
    %p217 = scmp.ne.s32.totalorder %s209, %s211
    %p218 = scmp.eq.s32.totalorder %s26, 1
    %p219 = por %p217, %p218
    %p220 = scmp.ne.s32.totalorder %s211, %s212
    %p221 = scmp.eq.s32.totalorder %s26, 0
    %p222 = por %p220, %p221
    %p223 = scmp.ne.s32.totalorder %s211, %s212
    %p224 = scmp.eq.s32.totalorder %s27, 1
    %p225 = por %p223, %p224
    %p227 = scmp.ne.s32.totalorder %s212, %s226
    %p228 = scmp.eq.s32.totalorder %s27, 0
    %p229 = por %p227, %p228
    %s231 = sadd.s32 %s230, 1
    %p234 = scmp.eq.s32.totalorder %s21, 1
    %p235 = scmp.ne.s32.totalorder %s230, %s232
    %p236 = scmp.eq.s32.totalorder %s21, 0
    %p237 = por %p235, %p236
    %p238 = scmp.ne.s32.totalorder %s230, %s232
    %p239 = scmp.eq.s32.totalorder %s26, 1
    %p240 = por %p238, %p239
    %p241 = scmp.ne.s32.totalorder %s232, %s233
    %p242 = scmp.eq.s32.totalorder %s26, 0
    %p243 = por %p241, %p242
    %p244 = scmp.ne.s32.totalorder %s232, %s233
    %p245 = scmp.eq.s32.totalorder %s27, 1
    %p246 = por %p244, %p245
    %p248 = scmp.ne.s32.totalorder %s233, %s247
    %p249 = scmp.eq.s32.totalorder %s27, 0
    %p250 = por %p248, %p249
    %s252 = sadd.s32 %s251, 1
    %p255 = scmp.eq.s32.totalorder %s21, 1
    %p256 = scmp.ne.s32.totalorder %s251, %s253
    %p257 = scmp.eq.s32.totalorder %s21, 0
    %p258 = por %p256, %p257
    %p259 = scmp.ne.s32.totalorder %s251, %s253
    %p260 = scmp.eq.s32.totalorder %s26, 1
    %p261 = por %p259, %p260
    %p262 = scmp.ne.s32.totalorder %s253, %s254
    %p263 = scmp.eq.s32.totalorder %s26, 0
    %p264 = por %p262, %p263
    %p265 = scmp.ne.s32.totalorder %s253, %s254
    %p266 = scmp.eq.s32.totalorder %s27, 1
    %p267 = por %p265, %p266
    %p269 = scmp.ne.s32.totalorder %s254, %s268
    %p270 = scmp.eq.s32.totalorder %s27, 0
    %p271 = por %p269, %p270
    %s273 = sadd.s32 %s272, 1
    %p276 = scmp.eq.s32.totalorder %s21, 1
    %p277 = scmp.ne.s32.totalorder %s272, %s274
    %p278 = scmp.eq.s32.totalorder %s21, 0
    %p279 = por %p277, %p278
    %p280 = scmp.ne.s32.totalorder %s272, %s274
    %p281 = scmp.eq.s32.totalorder %s26, 1
    %p282 = por %p280, %p281
    %p283 = scmp.ne.s32.totalorder %s274, %s275
    %p284 = scmp.eq.s32.totalorder %s26, 0
    %p285 = por %p283, %p284
    %p286 = scmp.ne.s32.totalorder %s274, %s275
    %p287 = scmp.eq.s32.totalorder %s27, 1
    %p288 = por %p286, %p287
    %p290 = scmp.ne.s32.totalorder %s275, %s289
    %p291 = scmp.eq.s32.totalorder %s27, 0
    %p292 = por %p290, %p291
    %s294 = sadd.s32 %s293, 1
    %p297 = scmp.eq.s32.totalorder %s21, 1
    %p298 = scmp.ne.s32.totalorder %s293, %s295
    %p299 = scmp.eq.s32.totalorder %s21, 0
    %p300 = por %p298, %p299
    %p301 = scmp.ne.s32.totalorder %s293, %s295
    %p302 = scmp.eq.s32.totalorder %s26, 1
    %p303 = por %p301, %p302
    %p304 = scmp.ne.s32.totalorder %s295, %s296
    %p305 = scmp.eq.s32.totalorder %s26, 0
    %p306 = por %p304, %p305
    %p307 = scmp.ne.s32.totalorder %s295, %s296
    %p308 = scmp.eq.s32.totalorder %s27, 1
    %p309 = por %p307, %p308
    %p311 = scmp.ne.s32.totalorder %s296, %s310
    %p312 = scmp.eq.s32.totalorder %s27, 0
    %p313 = por %p311, %p312
    %s315 = sadd.s32 %s314, 1
    %p318 = scmp.eq.s32.totalorder %s21, 1
    %p319 = scmp.ne.s32.totalorder %s314, %s316
    %p320 = scmp.eq.s32.totalorder %s21, 0
    %p321 = por %p319, %p320
    %p322 = scmp.ne.s32.totalorder %s314, %s316
    %p323 = scmp.eq.s32.totalorder %s26, 1
    %p324 = por %p322, %p323
    %p325 = scmp.ne.s32.totalorder %s316, %s317
    %p326 = scmp.eq.s32.totalorder %s26, 0
    %p327 = por %p325, %p326
    %p328 = scmp.ne.s32.totalorder %s316, %s317
    %p329 = scmp.eq.s32.totalorder %s27, 1
    %p330 = por %p328, %p329
    %p332 = scmp.ne.s32.totalorder %s317, %s331
    %p333 = scmp.eq.s32.totalorder %s27, 0
    %p334 = por %p332, %p333
    %s335 = ssub.s32 %s28, %s40
    %s336 = ssub.s32 %s29, %s36
    %s337 = sor.u32 %s335, %s336
    %p338 = scmp.eq.s32.totalorder %s337, 0
    %s340 = sadd.s32 %s339, 1
    %s341 = scalar_select %p338, %s339, %s340
    %p344 = pneg %p338
    %p345 = scmp.eq.s32.totalorder %s21, 1
    %p346 = por %p344, %p345
    %p347 = scmp.ne.s32.totalorder %s339, %s342
    %p348 = scmp.eq.s32.totalorder %s21, 0
    %p349 = por %p347, %p348
    %p350 = scmp.ne.s32.totalorder %s339, %s342
    %p351 = scmp.eq.s32.totalorder %s26, 1
    %p352 = por %p350, %p351
    %p353 = scmp.ne.s32.totalorder %s342, %s343
    %p354 = scmp.eq.s32.totalorder %s26, 0
    %p355 = por %p353, %p354
    %p356 = scmp.ne.s32.totalorder %s342, %s343
    %p357 = scmp.eq.s32.totalorder %s27, 1
    %p358 = por %p356, %p357
    %p360 = scmp.ne.s32.totalorder %s343, %s359
    %p361 = scmp.eq.s32.totalorder %s27, 0
    %p362 = por %p360, %p361
    %p363 = scmp.le.s32.totalorder 1, %s21
    %p364 = scmp.lt.s32.totalorder %s21, 3
    %p365 = pnand %p363, %p364
    %p366 = pneg %p365
    // Predicated region
    $region9: #{seg_forward.1} parent=5 // pred_check
      _
    $region10: #{seg_forward.1} parent=5 // pred_check_branch
      %368 = sbr.rel (%p365) target = $region12
    $region11: #{seg_forward.1} parent=5 // pred_region
      %s369 = ssub.s32 %s21, 1
      // Predicated region
      $region13: #{seg_forward.1} parent=11 // pred_check
        %p370 = pneg %p138
      $region14: #{seg_forward.1} parent=11 // pred_check_branch
        %372 = sbr.rel (%p370) target = $region16
      $region15: #{seg_forward.1} parent=11 // pred_region
        _
      $region16: #{seg_forward.1} parent=11 // pred_fallthru
        _
      // Predicated region
      $region17: #{seg_forward.1} parent=11 // pred_check
        %p373 = pneg %p159
      $region18: #{seg_forward.1} parent=11 // pred_check_branch
        %375 = sbr.rel (%p373) target = $region20
      $region19: #{seg_forward.1} parent=11 // pred_region
        _
      $region20: #{seg_forward.1} parent=11 // pred_fallthru
        _
      // Predicated region
      $region21: #{seg_forward.1} parent=11 // pred_check
        %p376 = pneg %p180
      $region22: #{seg_forward.1} parent=11 // pred_check_branch
        %378 = sbr.rel (%p376) target = $region24
      $region23: #{seg_forward.1} parent=11 // pred_region
        _
      $region24: #{seg_forward.1} parent=11 // pred_fallthru
        _
      // Predicated region
      $region25: #{seg_forward.1} parent=11 // pred_check
        %p379 = pneg %p201
      $region26: #{seg_forward.1} parent=11 // pred_check_branch
        %381 = sbr.rel (%p379) target = $region28
      $region27: #{seg_forward.1} parent=11 // pred_region
        _
      $region28: #{seg_forward.1} parent=11 // pred_fallthru
        _
      // Predicated region
      $region29: #{seg_forward.1} parent=11 // pred_check
        %p382 = pneg %p222
      $region30: #{seg_forward.1} parent=11 // pred_check_branch
        %384 = sbr.rel (%p382) target = $region32
      $region31: #{seg_forward.1} parent=11 // pred_region
        _
      $region32: #{seg_forward.1} parent=11 // pred_fallthru
        _
      // Predicated region
      $region33: #{seg_forward.1} parent=11 // pred_check
        %p385 = pneg %p243
      $region34: #{seg_forward.1} parent=11 // pred_check_branch
        %387 = sbr.rel (%p385) target = $region36
      $region35: #{seg_forward.1} parent=11 // pred_region
        _
      $region36: #{seg_forward.1} parent=11 // pred_fallthru
        _
      // Predicated region
      $region37: #{seg_forward.1} parent=11 // pred_check
        %p388 = pneg %p264
      $region38: #{seg_forward.1} parent=11 // pred_check_branch
        %390 = sbr.rel (%p388) target = $region40
      $region39: #{seg_forward.1} parent=11 // pred_region
        _
      $region40: #{seg_forward.1} parent=11 // pred_fallthru
        _
      // Predicated region
      $region41: #{seg_forward.1} parent=11 // pred_check
        %p391 = pneg %p285
      $region42: #{seg_forward.1} parent=11 // pred_check_branch
        %393 = sbr.rel (%p391) target = $region44
      $region43: #{seg_forward.1} parent=11 // pred_region
        _
      $region44: #{seg_forward.1} parent=11 // pred_fallthru
        _
      // Predicated region
      $region45: #{seg_forward.1} parent=11 // pred_check
        %p394 = pneg %p306
      $region46: #{seg_forward.1} parent=11 // pred_check_branch
        %396 = sbr.rel (%p394) target = $region48
      $region47: #{seg_forward.1} parent=11 // pred_region
        _
      $region48: #{seg_forward.1} parent=11 // pred_fallthru
        _
      // Predicated region
      $region49: #{seg_forward.1} parent=11 // pred_check
        %p397 = pneg %p327
      $region50: #{seg_forward.1} parent=11 // pred_check_branch
        %399 = sbr.rel (%p397) target = $region52
      $region51: #{seg_forward.1} parent=11 // pred_region
        _
      $region52: #{seg_forward.1} parent=11 // pred_fallthru
        _
    $region12: #{seg_forward.1} parent=5 // pred_fallthru
      _
    %p400 = scmp.lt.s32.totalorder %s21, 2
    // Predicated region
    $region53: #{seg_forward.1} parent=5 // pred_check
      %p401 = pneg %p400
    $region54: #{seg_forward.1} parent=5 // pred_check_branch
      %403 = sbr.rel (%p401) target = $region56
    $region55: #{seg_forward.1} parent=5 // pred_region
      // Predicated region
      $region57: #{seg_forward.1} parent=55 // pred_check
        %p404 = pneg %p55
      $region58: #{seg_forward.1} parent=55 // pred_check_branch
        %406 = sbr.rel (%p404) target = $region60
      $region59: #{seg_forward.1} parent=55 // pred_region
        %s407 = smul.u32 2, %s29
        %p408 = scmp.lt.s32.totalorder %s28, 1
        %s409 = scalar_select %p408, %s28, 1
        %p410 = scmp.lt.s32.totalorder %s407, 1
        %s411 = scalar_select %p410, %s407, 1
        %s412 = smul.addr %s411, 2
        %s413 = smul.addr %s409, 4
        %s414 = sadd.s32 %s412, %s413
        %s415 = smul.addr %s414, 4
        %s416 = scalar_lea.vmem %s0, %s415
        %s417 = smul.u32 2, %s29
      $region60: #{seg_forward.1} parent=55 // pred_fallthru
        _
      // Predicated region
      $region61: #{seg_forward.1} parent=55 // pred_check
        %p418 = pneg %p83
      $region62: #{seg_forward.1} parent=55 // pred_check_branch
        %420 = sbr.rel (%p418) target = $region64
      $region63: #{seg_forward.1} parent=55 // pred_region
        %s421 = smul.u32 2, %s29
        %p422 = scmp.lt.s32.totalorder %s28, 1
        %s423 = scalar_select %p422, %s28, 1
        %p424 = scmp.lt.s32.totalorder %s421, 1
        %s425 = scalar_select %p424, %s421, 1
        %s426 = smul.addr %s423, 8
        %s427 = sadd.s32 %s425, %s426
        %s428 = smul.addr %s427, 4
        %s429 = scalar_lea.vmem %s1, %s428
        %s430 = smul.u32 2, %s29
      $region64: #{seg_forward.1} parent=55 // pred_fallthru
        _
      // Predicated region
      $region65: #{seg_forward.1} parent=55 // pred_check
        %p431 = pneg %p111
      $region66: #{seg_forward.1} parent=55 // pred_check_branch
        %433 = sbr.rel (%p431) target = $region68
      $region67: #{seg_forward.1} parent=55 // pred_region
        %s434 = smul.u32 2, %s29
        %p435 = scmp.lt.s32.totalorder %s28, 1
        %s436 = scalar_select %p435, %s28, 1
        %p437 = scmp.lt.s32.totalorder %s434, 1
        %s438 = scalar_select %p437, %s434, 1
        %s439 = smul.addr %s438, 2
        %s440 = smul.addr %s436, 16
        %s441 = sadd.s32 %s439, %s440
        %s442 = smul.addr %s441, 4
        %s443 = scalar_lea.vmem %s2, %s442
        %s444 = smul.u32 2, %s29
      $region68: #{seg_forward.1} parent=55 // pred_fallthru
        _
    $region56: #{seg_forward.1} parent=5 // pred_fallthru
      _
    %p445 = scmp.le.s32.totalorder 1, %s21
    %p446 = scmp.lt.s32.totalorder %s21, 3
    %p447 = pnand %p445, %p446
    %p448 = pneg %p447
    // Predicated region
    $region69: #{seg_forward.1} parent=5 // pred_check
      _
    $region70: #{seg_forward.1} parent=5 // pred_check_branch
      %450 = sbr.rel (%p447) target = $region72
    $region71: #{seg_forward.1} parent=5 // pred_region
      %s451 = ssub.s32 %s21, 1
      %s452 = smul.u32 2, %s31
      %p453 = scmp.lt.s32.totalorder %s30, 1
      %s454 = scalar_select %p453, %s30, 1
      %p455 = scmp.lt.s32.totalorder %s452, 1
      %s456 = scalar_select %p455, %s452, 1
      %s457 = smul.addr %s456, 2
      %s458 = smul.addr %s454, 4
      %s459 = sadd.s32 %s457, %s458
      %s460 = smul.addr %s459, 4
      %s461 = scalar_lea.vmem %s0, %s460
      %p462 = pneg %p61
      %p463 = pneg %p58
      %s464 = smul.u32 2, %s31
      %p465 = scmp.lt.s32.totalorder %s30, 1
      %s466 = scalar_select %p465, %s30, 1
      %p467 = scmp.lt.s32.totalorder %s464, 1
      %s468 = scalar_select %p467, %s464, 1
      %s469 = smul.addr %s466, 8
      %s470 = sadd.s32 %s468, %s469
      %s471 = smul.addr %s470, 4
      %s472 = scalar_lea.vmem %s1, %s471
      %p473 = pneg %p89
      %p474 = pneg %p86
      %s475 = smul.u32 2, %s31
      %p476 = scmp.lt.s32.totalorder %s30, 1
      %s477 = scalar_select %p476, %s30, 1
      %p478 = scmp.lt.s32.totalorder %s475, 1
      %s479 = scalar_select %p478, %s475, 1
      %s480 = smul.addr %s479, 2
      %s481 = smul.addr %s477, 16
      %s482 = sadd.s32 %s480, %s481
      %s483 = smul.addr %s482, 4
      %s484 = scalar_lea.vmem %s2, %s483
      %p485 = pneg %p117
      %p486 = pneg %p114
      %p487 = pneg %p138
      %p488 = pneg %p135
      %p489 = pneg %p159
      %p490 = pneg %p156
      %p491 = pneg %p180
      %p492 = pneg %p177
      %p493 = pneg %p201
      %p494 = pneg %p198
      %p495 = pneg %p222
      %p496 = pneg %p219
      %p497 = pneg %p243
      %p498 = pneg %p240
      %p499 = pneg %p264
      %p500 = pneg %p261
      %p501 = pneg %p285
      %p502 = pneg %p282
      %p503 = pneg %p306
      %p504 = pneg %p303
      %p505 = pneg %p327
      %p506 = pneg %p324
      %p507 = pneg %p355
      %p508 = pneg %p352
      %s509 = smul.u32 2, %s31
      %p510 = scmp.lt.s32.totalorder %s30, 1
      %s511 = scalar_select %p510, %s30, 1
      %p512 = scmp.lt.s32.totalorder %s509, 1
      %s513 = scalar_select %p512, %s509, 1
      %s514 = smul.addr %s511, 2
      %s515 = sadd.s32 %s513, %s514
      %s516 = smul.addr %s515, 8
      %s517 = scalar_lea.vmem %s13, %s516
      %s518 = smul.u32 2, %s31
      %p519 = scmp.lt.s32.totalorder %s30, 1
      %s520 = scalar_select %p519, %s30, 1
      %p521 = scmp.lt.s32.totalorder %s518, 1
      %s522 = scalar_select %p521, %s518, 1
      %s523 = smul.addr %s522, 2
      %s524 = smul.addr %s520, 4
      %s525 = sadd.s32 %s523, %s524
      %s526 = smul.addr %s525, 4
      %s527 = scalar_lea.vmem %s0, %s526
      %s528 = smul.u32 2, %s31
      %s529 = smul.u32 2, %s31
      %p530 = scmp.lt.s32.totalorder %s30, 1
      %s531 = scalar_select %p530, %s30, 1
      %p532 = scmp.lt.s32.totalorder %s529, 1
      %s533 = scalar_select %p532, %s529, 1
      %s534 = smul.addr %s531, 8
      %s535 = sadd.s32 %s533, %s534
      %s536 = smul.addr %s535, 4
      %s537 = scalar_lea.vmem %s1, %s536
      %s538 = smul.u32 2, %s31
      %s539 = smul.u32 2, %s31
      %p540 = scmp.lt.s32.totalorder %s30, 1
      %s541 = scalar_select %p540, %s30, 1
      %p542 = scmp.lt.s32.totalorder %s539, 1
      %s543 = scalar_select %p542, %s539, 1
      %s544 = smul.addr %s543, 2
      %s545 = smul.addr %s541, 16
      %s546 = sadd.s32 %s544, %s545
      %s547 = smul.addr %s546, 4
      %s548 = scalar_lea.vmem %s2, %s547
      %s549 = smul.u32 2, %s31
      %s550 = smul.u32 2, %s31
      %p551 = scmp.lt.s32.totalorder %s30, 1
      %s552 = scalar_select %p551, %s30, 1
      %p553 = scmp.lt.s32.totalorder %s550, 1
      %s554 = scalar_select %p553, %s550, 1
      %s555 = smul.addr %s552, 2
      %s556 = sadd.s32 %s554, %s555
      %s557 = smul.addr %s556, 8
      %s558 = scalar_lea.vmem %s13, %s557
      %s559 = smul.u32 2, %s31
      %v561 = vld [vmem:[%s527] sm:$0xff]
      %v562 = vld [vmem:[%s527 + $0x8] sm:$0xff]
      %v563 = vld [vmem:[%s3] sm:$0xf]
      %v564 = vld [vmem:[%s3 + $0x4] sm:$0xf]
      %v565 = vld [vmem:[%s3 + $0x8] sm:$0xf]
      %v566 = vld [vmem:[%s3 + $0xc] sm:$0xf]
      %v567 = vld [vmem:[%s3 + $0x10] sm:$0xf]
      %v568 = vld [vmem:[%s3 + $0x14] sm:$0xf]
      %v569 = vld [vmem:[%s3 + $0x18] sm:$0xf]
      %v570 = vld [vmem:[%s3 + $0x1c] sm:$0xf]
      %v571 = vld [vmem:[%s3 + $0x20] sm:$0xf]
      %v572 = vld [vmem:[%s3 + $0x24] sm:$0xf]
      %v573 = vld [vmem:[%s3 + $0x28] sm:$0xf]
      %v574 = vld [vmem:[%s3 + $0x2c] sm:$0xf]
      %v575 = vld [vmem:[%s3 + $0x30] sm:$0xf]
      %v576 = vld [vmem:[%s3 + $0x34] sm:$0xf]
      %v577 = vld [vmem:[%s3 + $0x38] sm:$0xf]
      %v578 = vld [vmem:[%s3 + $0x3c] sm:$0xf]
      %v579 = vld [vmem:[%s3 + $0x40] sm:$0xf]
      %v580 = vld [vmem:[%s3 + $0x44] sm:$0xf]
      %v581 = vld [vmem:[%s3 + $0x48] sm:$0xf]
      %v582 = vld [vmem:[%s3 + $0x4c] sm:$0xf]
      %v583 = vld [vmem:[%s3 + $0x50] sm:$0xf]
      %v584 = vld [vmem:[%s3 + $0x54] sm:$0xf]
      %v585 = vld [vmem:[%s3 + $0x58] sm:$0xf]
      %v586 = vld [vmem:[%s3 + $0x5c] sm:$0xf]
      %v587 = vld [vmem:[%s3 + $0x60] sm:$0xf]
      %v588 = vld [vmem:[%s3 + $0x64] sm:$0xf]
      %v589 = vld [vmem:[%s3 + $0x68] sm:$0xf]
      %v590 = vld [vmem:[%s3 + $0x6c] sm:$0xf]
      %v591 = vld [vmem:[%s3 + $0x70] sm:$0xf]
      %v592 = vld [vmem:[%s3 + $0x74] sm:$0xf]
      %v593 = vld [vmem:[%s3 + $0x78] sm:$0xf]
      %v594 = vld [vmem:[%s3 + $0x7c] sm:$0xf]
      %v595 = vld [vmem:[%s4] sm:$0x1]
      %v597 = vlaneseq
      %v598 = vshrl.u32 %v597, 7
      %v599 = vsub.s32 0, %v598
      %v600 = vrot.slane %v595, %v599
      %v604 = vunpack.c.l.b16 %v561
      %v605 = vunpack.c.h.b16 %v561
      %v606 = vunpack.c.l.b16 %v562
      %v607 = vunpack.c.h.b16 %v562
      %v608 = vpack.c.b16 %v606, %v604
      %v609 = vpack.c.b16 %v607, %v605
      %v644 = vunpack.c.l.b16 %v563
      %v645 = vunpack.c.l.b16 %v564
      %v646 = vunpack.c.l.b16 %v565
      %v647 = vunpack.c.l.b16 %v566
      %v648 = vunpack.c.l.b16 %v567
      %v649 = vunpack.c.l.b16 %v568
      %v650 = vunpack.c.l.b16 %v569
      %v651 = vunpack.c.l.b16 %v570
      %v652 = vunpack.c.l.b16 %v571
      %v653 = vunpack.c.l.b16 %v572
      %v654 = vunpack.c.l.b16 %v573
      %v655 = vunpack.c.l.b16 %v574
      %v656 = vunpack.c.l.b16 %v575
      %v657 = vunpack.c.l.b16 %v576
      %v658 = vunpack.c.l.b16 %v577
      %v659 = vunpack.c.l.b16 %v578
      %v660 = vunpack.c.l.b16 %v579
      %v661 = vunpack.c.l.b16 %v580
      %v662 = vunpack.c.l.b16 %v581
      %v663 = vunpack.c.l.b16 %v582
      %v664 = vunpack.c.l.b16 %v583
      %v665 = vunpack.c.l.b16 %v584
      %v666 = vunpack.c.l.b16 %v585
      %v667 = vunpack.c.l.b16 %v586
      %v668 = vunpack.c.l.b16 %v587
      %v669 = vunpack.c.l.b16 %v588
      %v670 = vunpack.c.l.b16 %v589
      %v671 = vunpack.c.l.b16 %v590
      %v672 = vunpack.c.l.b16 %v591
      %v673 = vunpack.c.l.b16 %v592
      %v674 = vunpack.c.l.b16 %v593
      %v675 = vunpack.c.l.b16 %v594
      %v676 = vpack.c.b16 %v645, %v644
      %v677 = vpack.c.b16 %v647, %v646
      %v678 = vpack.c.b16 %v649, %v648
      %v679 = vpack.c.b16 %v651, %v650
      %v680 = vpack.c.b16 %v653, %v652
      %v681 = vpack.c.b16 %v655, %v654
      %v682 = vpack.c.b16 %v657, %v656
      %v683 = vpack.c.b16 %v659, %v658
      %v684 = vpack.c.b16 %v661, %v660
      %v685 = vpack.c.b16 %v663, %v662
      %v686 = vpack.c.b16 %v665, %v664
      %v687 = vpack.c.b16 %v667, %v666
      %v688 = vpack.c.b16 %v669, %v668
      %v689 = vpack.c.b16 %v671, %v670
      %v690 = vpack.c.b16 %v673, %v672
      %v691 = vpack.c.b16 %v675, %v674
      %708 = vmatprep.subr.bf16.mxu0 0
      %709 = vmatpush1.bf16.msra.mxu0 %v683
      %710 = vmatprep.subr.bf16.mxu0 0
      %711 = vmatpush1.bf16.msra.mxu0 %v682
      %712 = vmatprep.subr.bf16.mxu0 0
      %713 = vmatpush1.bf16.msra.mxu0 %v681
      %714 = vmatprep.subr.bf16.mxu0 0
      %715 = vmatpush1.bf16.msra.mxu0 %v680
      %716 = vmatprep.subr.bf16.mxu0 0
      %717 = vmatpush1.bf16.msra.mxu0 %v679
      %718 = vmatprep.subr.bf16.mxu0 0
      %719 = vmatpush1.bf16.msra.mxu0 %v678
      %720 = vmatprep.subr.bf16.mxu0 0
      %721 = vmatpush1.bf16.msra.mxu0 %v677
      %722 = vmatprep.subr.bf16.mxu0 0
      %723 = vmatpush1.bf16.msra.mxu0 %v676
      %724 = vmatprep.subr.bf16.mxu0 0
      %725 = vmatpush2.bf16.msra.mxu0 %v691
      %726 = vmatprep.subr.bf16.mxu0 0
      %727 = vmatpush2.bf16.msra.mxu0 %v690
      %728 = vmatprep.subr.bf16.mxu0 0
      %729 = vmatpush2.bf16.msra.mxu0 %v689
      %730 = vmatprep.subr.bf16.mxu0 0
      %731 = vmatpush2.bf16.msra.mxu0 %v688
      %732 = vmatprep.subr.bf16.mxu0 0
      %733 = vmatpush2.bf16.msra.mxu0 %v687
      %734 = vmatprep.subr.bf16.mxu0 0
      %735 = vmatpush2.bf16.msra.mxu0 %v686
      %736 = vmatprep.subr.bf16.mxu0 0
      %737 = vmatpush2.bf16.msra.mxu0 %v685
      %738 = vmatprep.subr.bf16.mxu0 0
      %739 = vmatpush2.bf16.msra.mxu0 %v684
      %740 = vmatprep.mubr.bf16.mxu0 %v609
      %741 = vmatmul.mubr.bf16.gmra.mxu0 %v608
      %v742 = vpop.f32.mrf.mxu0
      %v743 = vadd.f32 %v600, %v742
      %v744 = vpop.f32.mrf.mxu0
      %v745 = vpop.f32.mrf.mxu0
      %v746 = vadd.f32 %v600, %v745
      %v747 = vpop.f32.mrf.mxu0
      %748 = vdwg.mxu0
      %v749 = vsub.f32 0.0, %v743
      %v750 = vsub.f32 0.0, %v746
      %v751 = vmul.f32 %v749, 1.442695
      %v752 = vpow.pop %v751
      %v753 = vmul.f32 %v750, 1.442695
      %v754 = vpow.pop %v753
      %v755 = vadd.f32 %v752, 1.0
      %v756 = vadd.f32 %v754, 1.0
      %v757 = vrcp.pop %v755
      %v758 = vrcp.pop %v756
      %v759 = vmul.f32 %v743, %v757
      %v760 = vmul.f32 %v746, %v758
      %v761 = vpack.c.bf16 %v760, %v759
      %v762 = vld [vmem:[%s5] sm:$0xf]
      %v763 = vld [vmem:[%s5 + $0x4] sm:$0xf]
      %v764 = vld [vmem:[%s5 + $0x8] sm:$0xf]
      %v765 = vld [vmem:[%s5 + $0xc] sm:$0xf]
      %v766 = vld [vmem:[%s5 + $0x10] sm:$0xf]
      %v767 = vld [vmem:[%s5 + $0x14] sm:$0xf]
      %v768 = vld [vmem:[%s5 + $0x18] sm:$0xf]
      %v769 = vld [vmem:[%s5 + $0x1c] sm:$0xf]
      %v770 = vld [vmem:[%s5 + $0x20] sm:$0xf]
      %v771 = vld [vmem:[%s5 + $0x24] sm:$0xf]
      %v772 = vld [vmem:[%s5 + $0x28] sm:$0xf]
      %v773 = vld [vmem:[%s5 + $0x2c] sm:$0xf]
      %v774 = vld [vmem:[%s5 + $0x30] sm:$0xf]
      %v775 = vld [vmem:[%s5 + $0x34] sm:$0xf]
      %v776 = vld [vmem:[%s5 + $0x38] sm:$0xf]
      %v777 = vld [vmem:[%s5 + $0x3c] sm:$0xf]
      %v794 = vunpack.c.l.b16 %v762
      %v795 = vunpack.c.l.b16 %v763
      %v796 = vunpack.c.l.b16 %v764
      %v797 = vunpack.c.l.b16 %v765
      %v798 = vunpack.c.l.b16 %v766
      %v799 = vunpack.c.l.b16 %v767
      %v800 = vunpack.c.l.b16 %v768
      %v801 = vunpack.c.l.b16 %v769
      %v802 = vunpack.c.l.b16 %v770
      %v803 = vunpack.c.l.b16 %v771
      %v804 = vunpack.c.l.b16 %v772
      %v805 = vunpack.c.l.b16 %v773
      %v806 = vunpack.c.l.b16 %v774
      %v807 = vunpack.c.l.b16 %v775
      %v808 = vunpack.c.l.b16 %v776
      %v809 = vunpack.c.l.b16 %v777
      %v810 = vpack.c.b16 %v795, %v794
      %v811 = vpack.c.b16 %v797, %v796
      %v812 = vpack.c.b16 %v799, %v798
      %v813 = vpack.c.b16 %v801, %v800
      %v814 = vpack.c.b16 %v803, %v802
      %v815 = vpack.c.b16 %v805, %v804
      %v816 = vpack.c.b16 %v807, %v806
      %v817 = vpack.c.b16 %v809, %v808
      %826 = vmatprep.subr.bf16.mxu0 0
      %827 = vmatpush1.bf16.msra.mxu0 %v817
      %828 = vmatprep.subr.bf16.mxu0 0
      %829 = vmatpush1.bf16.msra.mxu0 %v816
      %830 = vmatprep.subr.bf16.mxu0 0
      %831 = vmatpush1.bf16.msra.mxu0 %v815
      %832 = vmatprep.subr.bf16.mxu0 0
      %833 = vmatpush1.bf16.msra.mxu0 %v814
      %834 = vmatprep.subr.bf16.mxu0 0
      %835 = vmatpush1.bf16.msra.mxu0 %v813
      %836 = vmatprep.subr.bf16.mxu0 0
      %837 = vmatpush1.bf16.msra.mxu0 %v812
      %838 = vmatprep.subr.bf16.mxu0 0
      %839 = vmatpush1.bf16.msra.mxu0 %v811
      %840 = vmatprep.subr.bf16.mxu0 0
      %841 = vmatpush1.bf16.msra.mxu0 %v810
      %842 = vmatprep.subr.bf16.mxu0 0
      %843 = vmatpush2.bf16.msra.mxu0 0
      %844 = vmatprep.subr.bf16.mxu0 0
      %845 = vmatpush2.bf16.msra.mxu0 0
      %846 = vmatprep.subr.bf16.mxu0 0
      %847 = vmatpush2.bf16.msra.mxu0 0
      %848 = vmatprep.subr.bf16.mxu0 0
      %849 = vmatpush2.bf16.msra.mxu0 0
      %850 = vmatprep.subr.bf16.mxu0 0
      %851 = vmatpush2.bf16.msra.mxu0 0
      %852 = vmatprep.subr.bf16.mxu0 0
      %853 = vmatpush2.bf16.msra.mxu0 0
      %854 = vmatprep.subr.bf16.mxu0 0
      %855 = vmatpush2.bf16.msra.mxu0 0
      %856 = vmatprep.subr.bf16.mxu0 0
      %857 = vmatpush2.bf16.msra.mxu0 0
      %858 = vmatprep.mubr.bf16.mxu0 0
      %859 = vmatmul.mubr.bf16.gmra.mxu0 %v761
      %v860 = vpop.f32.mrf.mxu0
      %v861 = vadd.f32 0.0, %v860
      %v862 = vpop.f32.mrf.mxu0
      %v863 = vpop.f32.mrf.mxu0
      %v864 = vadd.f32 0.0, %v863
      %v865 = vpop.f32.mrf.mxu0
      %866 = vdwg.mxu0
      %v867 = vld [vmem:[%s537] sm:$0xf]
      %v868 = vld [vmem:[%s537 + $0x4] sm:$0xf]
      %v869 = vld [vmem:[%s6] sm:$0xf]
      %v870 = vld [vmem:[%s6 + $0x4] sm:$0xf]
      %v871 = vld [vmem:[%s6 + $0x8] sm:$0xf]
      %v872 = vld [vmem:[%s6 + $0xc] sm:$0xf]
      %v873 = vld [vmem:[%s6 + $0x10] sm:$0xf]
      %v874 = vld [vmem:[%s6 + $0x14] sm:$0xf]
      %v875 = vld [vmem:[%s6 + $0x18] sm:$0xf]
      %v876 = vld [vmem:[%s6 + $0x1c] sm:$0xf]
      %v877 = vld [vmem:[%s6 + $0x20] sm:$0xf]
      %v878 = vld [vmem:[%s6 + $0x24] sm:$0xf]
      %v879 = vld [vmem:[%s6 + $0x28] sm:$0xf]
      %v880 = vld [vmem:[%s6 + $0x2c] sm:$0xf]
      %v881 = vld [vmem:[%s6 + $0x30] sm:$0xf]
      %v882 = vld [vmem:[%s6 + $0x34] sm:$0xf]
      %v883 = vld [vmem:[%s6 + $0x38] sm:$0xf]
      %v884 = vld [vmem:[%s6 + $0x3c] sm:$0xf]
      %v887 = vunpack.c.l.b16 %v867
      %v888 = vunpack.c.l.b16 %v868
      %v889 = vpack.c.b16 %v888, %v887
      %v907 = vunpack.c.l.b16 %v869
      %v908 = vunpack.c.l.b16 %v870
      %v909 = vunpack.c.l.b16 %v871
      %v910 = vunpack.c.l.b16 %v872
      %v911 = vunpack.c.l.b16 %v873
      %v912 = vunpack.c.l.b16 %v874
      %v913 = vunpack.c.l.b16 %v875
      %v914 = vunpack.c.l.b16 %v876
      %v915 = vunpack.c.l.b16 %v877
      %v916 = vunpack.c.l.b16 %v878
      %v917 = vunpack.c.l.b16 %v879
      %v918 = vunpack.c.l.b16 %v880
      %v919 = vunpack.c.l.b16 %v881
      %v920 = vunpack.c.l.b16 %v882
      %v921 = vunpack.c.l.b16 %v883
      %v922 = vunpack.c.l.b16 %v884
      %v923 = vpack.c.b16 %v908, %v907
      %v924 = vpack.c.b16 %v910, %v909
      %v925 = vpack.c.b16 %v912, %v911
      %v926 = vpack.c.b16 %v914, %v913
      %v927 = vpack.c.b16 %v916, %v915
      %v928 = vpack.c.b16 %v918, %v917
      %v929 = vpack.c.b16 %v920, %v919
      %v930 = vpack.c.b16 %v922, %v921
      %939 = vmatprep.subr.bf16.mxu0 0
      %940 = vmatpush1.bf16.msra.mxu0 %v930
      %941 = vmatprep.subr.bf16.mxu0 0
      %942 = vmatpush1.bf16.msra.mxu0 %v929
      %943 = vmatprep.subr.bf16.mxu0 0
      %944 = vmatpush1.bf16.msra.mxu0 %v928
      %945 = vmatprep.subr.bf16.mxu0 0
      %946 = vmatpush1.bf16.msra.mxu0 %v927
      %947 = vmatprep.subr.bf16.mxu0 0
      %948 = vmatpush1.bf16.msra.mxu0 %v926
      %949 = vmatprep.subr.bf16.mxu0 0
      %950 = vmatpush1.bf16.msra.mxu0 %v925
      %951 = vmatprep.subr.bf16.mxu0 0
      %952 = vmatpush1.bf16.msra.mxu0 %v924
      %953 = vmatprep.subr.bf16.mxu0 0
      %954 = vmatpush1.bf16.msra.mxu0 %v923
      %955 = vmatprep.subr.bf16.mxu0 0
      %956 = vmatpush2.bf16.msra.mxu0 0
      %957 = vmatprep.subr.bf16.mxu0 0
      %958 = vmatpush2.bf16.msra.mxu0 0
      %959 = vmatprep.subr.bf16.mxu0 0
      %960 = vmatpush2.bf16.msra.mxu0 0
      %961 = vmatprep.subr.bf16.mxu0 0
      %962 = vmatpush2.bf16.msra.mxu0 0
      %963 = vmatprep.subr.bf16.mxu0 0
      %964 = vmatpush2.bf16.msra.mxu0 0
      %965 = vmatprep.subr.bf16.mxu0 0
      %966 = vmatpush2.bf16.msra.mxu0 0
      %967 = vmatprep.subr.bf16.mxu0 0
      %968 = vmatpush2.bf16.msra.mxu0 0
      %969 = vmatprep.subr.bf16.mxu0 0
      %970 = vmatpush2.bf16.msra.mxu0 0
      %971 = vmatprep.mubr.bf16.mxu0 0
      %972 = vmatmul.mubr.bf16.gmra.mxu0 %v889
      %v973 = vpop.f32.mrf.mxu0
      %v974 = vadd.f32 0.0, %v973
      %v975 = vpop.f32.mrf.mxu0
      %v976 = vpop.f32.mrf.mxu0
      %v977 = vadd.f32 0.0, %v976
      %v978 = vpop.f32.mrf.mxu0
      %979 = vdwg.mxu0
      %v980 = vadd.f32 %v861, %v974
      %v981 = vadd.f32 %v864, %v977
      %v982 = vld [vmem:[%s7] sm:$0x1]
      %v984 = vlaneseq
      %v985 = vshrl.u32 %v984, 7
      %v986 = vsub.s32 0, %v985
      %v987 = vrot.slane %v982, %v986
      %v989 = vadd.f32 %v980, %v987
      %v990 = vadd.f32 %v981, %v987
      %v991 = vsub.f32 0.0, %v989
      %v992 = vsub.f32 0.0, %v990
      %v993 = vmul.f32 %v991, 1.442695
      %v994 = vpow.pop %v993
      %v995 = vmul.f32 %v992, 1.442695
      %v996 = vpow.pop %v995
      %v997 = vadd.f32 %v994, 1.0
      %v998 = vadd.f32 %v996, 1.0
      %v999 = vrcp.pop %v997
      %v1000 = vrcp.pop %v998
      %v1001 = vmul.f32 %v989, %v999
      %v1002 = vmul.f32 %v990, %v1000
      %v1003 = vpack.c.bf16 %v1002, %v1001
      %v1004 = vld [vmem:[%s8] sm:$0xf]
      %v1005 = vld [vmem:[%s8 + $0x4] sm:$0xf]
      %v1006 = vld [vmem:[%s8 + $0x8] sm:$0xf]
      %v1007 = vld [vmem:[%s8 + $0xc] sm:$0xf]
      %v1008 = vld [vmem:[%s8 + $0x10] sm:$0xf]
      %v1009 = vld [vmem:[%s8 + $0x14] sm:$0xf]
      %v1010 = vld [vmem:[%s8 + $0x18] sm:$0xf]
      %v1011 = vld [vmem:[%s8 + $0x1c] sm:$0xf]
      %v1012 = vld [vmem:[%s548] sm:$0xff]
      %v1013 = vld [vmem:[%s548 + $0x8] sm:$0xff]
      %v1014 = vld [vmem:[%s9] sm:$0xf]
      %v1015 = vld [vmem:[%s9 + $0x4] sm:$0xf]
      %v1016 = vld [vmem:[%s9 + $0x8] sm:$0xf]
      %v1017 = vld [vmem:[%s9 + $0xc] sm:$0xf]
      %v1018 = vld [vmem:[%s9 + $0x10] sm:$0xf]
      %v1019 = vld [vmem:[%s9 + $0x14] sm:$0xf]
      %v1020 = vld [vmem:[%s9 + $0x18] sm:$0xf]
      %v1021 = vld [vmem:[%s9 + $0x1c] sm:$0xf]
      %v1022 = vld [vmem:[%s9 + $0x20] sm:$0xf]
      %v1023 = vld [vmem:[%s9 + $0x24] sm:$0xf]
      %v1024 = vld [vmem:[%s9 + $0x28] sm:$0xf]
      %v1025 = vld [vmem:[%s9 + $0x2c] sm:$0xf]
      %v1026 = vld [vmem:[%s9 + $0x30] sm:$0xf]
      %v1027 = vld [vmem:[%s9 + $0x34] sm:$0xf]
      %v1028 = vld [vmem:[%s9 + $0x38] sm:$0xf]
      %v1029 = vld [vmem:[%s9 + $0x3c] sm:$0xf]
      %v1030 = vld [vmem:[%s9 + $0x40] sm:$0xf]
      %v1031 = vld [vmem:[%s9 + $0x44] sm:$0xf]
      %v1032 = vld [vmem:[%s9 + $0x48] sm:$0xf]
      %v1033 = vld [vmem:[%s9 + $0x4c] sm:$0xf]
      %v1034 = vld [vmem:[%s9 + $0x50] sm:$0xf]
      %v1035 = vld [vmem:[%s9 + $0x54] sm:$0xf]
      %v1036 = vld [vmem:[%s9 + $0x58] sm:$0xf]
      %v1037 = vld [vmem:[%s9 + $0x5c] sm:$0xf]
      %v1038 = vld [vmem:[%s9 + $0x60] sm:$0xf]
      %v1039 = vld [vmem:[%s9 + $0x64] sm:$0xf]
      %v1040 = vld [vmem:[%s9 + $0x68] sm:$0xf]
      %v1041 = vld [vmem:[%s9 + $0x6c] sm:$0xf]
      %v1042 = vld [vmem:[%s9 + $0x70] sm:$0xf]
      %v1043 = vld [vmem:[%s9 + $0x74] sm:$0xf]
      %v1044 = vld [vmem:[%s9 + $0x78] sm:$0xf]
      %v1045 = vld [vmem:[%s9 + $0x7c] sm:$0xf]
      %v1048 = vunpack.c.l.b16 %v1012
      %v1049 = vunpack.c.h.b16 %v1012
      %v1050 = vunpack.c.l.b16 %v1013
      %v1051 = vunpack.c.h.b16 %v1013
      %v1052 = vpack.c.b16 %v1050, %v1048
      %v1053 = vpack.c.b16 %v1051, %v1049
      %v1088 = vunpack.c.l.b16 %v1014
      %v1089 = vunpack.c.l.b16 %v1015
      %v1090 = vunpack.c.l.b16 %v1016
      %v1091 = vunpack.c.l.b16 %v1017
      %v1092 = vunpack.c.l.b16 %v1018
      %v1093 = vunpack.c.l.b16 %v1019
      %v1094 = vunpack.c.l.b16 %v1020
      %v1095 = vunpack.c.l.b16 %v1021
      %v1096 = vunpack.c.l.b16 %v1022
      %v1097 = vunpack.c.l.b16 %v1023
      %v1098 = vunpack.c.l.b16 %v1024
      %v1099 = vunpack.c.l.b16 %v1025
      %v1100 = vunpack.c.l.b16 %v1026
      %v1101 = vunpack.c.l.b16 %v1027
      %v1102 = vunpack.c.l.b16 %v1028
      %v1103 = vunpack.c.l.b16 %v1029
      %v1104 = vunpack.c.l.b16 %v1030
      %v1105 = vunpack.c.l.b16 %v1031
      %v1106 = vunpack.c.l.b16 %v1032
      %v1107 = vunpack.c.l.b16 %v1033
      %v1108 = vunpack.c.l.b16 %v1034
      %v1109 = vunpack.c.l.b16 %v1035
      %v1110 = vunpack.c.l.b16 %v1036
      %v1111 = vunpack.c.l.b16 %v1037
      %v1112 = vunpack.c.l.b16 %v1038
      %v1113 = vunpack.c.l.b16 %v1039
      %v1114 = vunpack.c.l.b16 %v1040
      %v1115 = vunpack.c.l.b16 %v1041
      %v1116 = vunpack.c.l.b16 %v1042
      %v1117 = vunpack.c.l.b16 %v1043
      %v1118 = vunpack.c.l.b16 %v1044
      %v1119 = vunpack.c.l.b16 %v1045
      %v1120 = vpack.c.b16 %v1089, %v1088
      %v1121 = vpack.c.b16 %v1091, %v1090
      %v1122 = vpack.c.b16 %v1093, %v1092
      %v1123 = vpack.c.b16 %v1095, %v1094
      %v1124 = vpack.c.b16 %v1097, %v1096
      %v1125 = vpack.c.b16 %v1099, %v1098
      %v1126 = vpack.c.b16 %v1101, %v1100
      %v1127 = vpack.c.b16 %v1103, %v1102
      %v1128 = vpack.c.b16 %v1105, %v1104
      %v1129 = vpack.c.b16 %v1107, %v1106
      %v1130 = vpack.c.b16 %v1109, %v1108
      %v1131 = vpack.c.b16 %v1111, %v1110
      %v1132 = vpack.c.b16 %v1113, %v1112
      %v1133 = vpack.c.b16 %v1115, %v1114
      %v1134 = vpack.c.b16 %v1117, %v1116
      %v1135 = vpack.c.b16 %v1119, %v1118
      %1152 = vmatprep.subr.bf16.mxu0 0
      %1153 = vmatpush1.bf16.msra.mxu0 %v1127
      %1154 = vmatprep.subr.bf16.mxu0 0
      %1155 = vmatpush1.bf16.msra.mxu0 %v1126
      %1156 = vmatprep.subr.bf16.mxu0 0
      %1157 = vmatpush1.bf16.msra.mxu0 %v1125
      %1158 = vmatprep.subr.bf16.mxu0 0
      %1159 = vmatpush1.bf16.msra.mxu0 %v1124
      %1160 = vmatprep.subr.bf16.mxu0 0
      %1161 = vmatpush1.bf16.msra.mxu0 %v1123
      %1162 = vmatprep.subr.bf16.mxu0 0
      %1163 = vmatpush1.bf16.msra.mxu0 %v1122
      %1164 = vmatprep.subr.bf16.mxu0 0
      %1165 = vmatpush1.bf16.msra.mxu0 %v1121
      %1166 = vmatprep.subr.bf16.mxu0 0
      %1167 = vmatpush1.bf16.msra.mxu0 %v1120
      %1168 = vmatprep.subr.bf16.mxu0 0
      %1169 = vmatpush2.bf16.msra.mxu0 %v1135
      %1170 = vmatprep.subr.bf16.mxu0 0
      %1171 = vmatpush2.bf16.msra.mxu0 %v1134
      %1172 = vmatprep.subr.bf16.mxu0 0
      %1173 = vmatpush2.bf16.msra.mxu0 %v1133
      %1174 = vmatprep.subr.bf16.mxu0 0
      %1175 = vmatpush2.bf16.msra.mxu0 %v1132
      %1176 = vmatprep.subr.bf16.mxu0 0
      %1177 = vmatpush2.bf16.msra.mxu0 %v1131
      %1178 = vmatprep.subr.bf16.mxu0 0
      %1179 = vmatpush2.bf16.msra.mxu0 %v1130
      %1180 = vmatprep.subr.bf16.mxu0 0
      %1181 = vmatpush2.bf16.msra.mxu0 %v1129
      %1182 = vmatprep.subr.bf16.mxu0 0
      %1183 = vmatpush2.bf16.msra.mxu0 %v1128
      %1184 = vmatprep.mubr.bf16.mxu0 %v1053
      %1185 = vmatmul.mubr.bf16.gmra.mxu0 %v1052
      %v1186 = vpop.f32.mrf.mxu0
      %v1187 = vadd.f32 0.0, %v1186
      %v1188 = vpop.f32.mrf.mxu0
      %v1189 = vpop.f32.mrf.mxu0
      %v1190 = vadd.f32 0.0, %v1189
      %v1191 = vpop.f32.mrf.mxu0
      %1192 = vdwg.mxu0
      %v1201 = vunpack.c.l.b16 %v1004
      %v1202 = vunpack.c.l.b16 %v1005
      %v1203 = vunpack.c.l.b16 %v1006
      %v1204 = vunpack.c.l.b16 %v1007
      %v1205 = vunpack.c.l.b16 %v1008
      %v1206 = vunpack.c.l.b16 %v1009
      %v1207 = vunpack.c.l.b16 %v1010
      %v1208 = vunpack.c.l.b16 %v1011
      %v1209 = vpack.c.b16 %v1202, %v1201
      %v1210 = vpack.c.b16 %v1204, %v1203
      %v1211 = vpack.c.b16 %v1206, %v1205
      %v1212 = vpack.c.b16 %v1208, %v1207
      %vm1217 = vcmask 523264
      %v1219 = vsel %vm1217, %v1003, 0
      %1221 = vmatprep.subr.bf16.mxu0 0
      %1222 = vmatpush1.bf16.msra.mxu0 0
      %1223 = vmatprep.subr.bf16.mxu0 0
      %1224 = vmatpush1.bf16.msra.mxu0 0
      %1225 = vmatprep.subr.bf16.mxu0 0
      %1226 = vmatpush1.bf16.msra.mxu0 0
      %1227 = vmatprep.subr.bf16.mxu0 0
      %1228 = vmatpush1.bf16.msra.mxu0 0
      %1229 = vmatprep.subr.bf16.mxu0 0
      %1230 = vmatpush1.bf16.msra.mxu0 %v1212
      %1231 = vmatprep.subr.bf16.mxu0 0
      %1232 = vmatpush1.bf16.msra.mxu0 %v1211
      %1233 = vmatprep.subr.bf16.mxu0 0
      %1234 = vmatpush1.bf16.msra.mxu0 %v1210
      %1235 = vmatprep.subr.bf16.mxu0 0
      %1236 = vmatpush1.bf16.msra.mxu0 %v1209
      %1237 = vmatprep.subr.bf16.mxu0 0
      %1238 = vmatpush2.bf16.msra.mxu0 0
      %1239 = vmatprep.subr.bf16.mxu0 0
      %1240 = vmatpush2.bf16.msra.mxu0 0
      %1241 = vmatprep.subr.bf16.mxu0 0
      %1242 = vmatpush2.bf16.msra.mxu0 0
      %1243 = vmatprep.subr.bf16.mxu0 0
      %1244 = vmatpush2.bf16.msra.mxu0 0
      %1245 = vmatprep.subr.bf16.mxu0 0
      %1246 = vmatpush2.bf16.msra.mxu0 0
      %1247 = vmatprep.subr.bf16.mxu0 0
      %1248 = vmatpush2.bf16.msra.mxu0 0
      %1249 = vmatprep.subr.bf16.mxu0 0
      %1250 = vmatpush2.bf16.msra.mxu0 0
      %1251 = vmatprep.subr.bf16.mxu0 0
      %1252 = vmatpush2.bf16.msra.mxu0 0
      %1253 = vmatprep.mubr.bf16.mxu0 0
      %1254 = vmatmul.mubr.bf16.gmra.mxu0 %v1219
      %v1255 = vpop.f32.mrf.mxu0
      %v1256 = vadd.f32 %v1187, %v1255
      %v1257 = vpop.f32.mrf.mxu0
      %v1258 = vpop.f32.mrf.mxu0
      %v1259 = vadd.f32 %v1190, %v1258
      %v1260 = vpop.f32.mrf.mxu0
      %1261 = vdwg.mxu0
      %v1262 = vld [vmem:[%s10] sm:$0x1]
      %v1264 = vlaneseq
      %v1265 = vshrl.u32 %v1264, 7
      %v1266 = vsub.s32 0, %v1265
      %v1267 = vrot.slane %v1262, %v1266
      %v1269 = vadd.f32 %v1256, %v1267
      %v1270 = vadd.f32 %v1259, %v1267
      %v1271 = vsub.f32 0.0, %v1269
      %v1272 = vsub.f32 0.0, %v1270
      %v1273 = vmul.f32 %v1271, 1.442695
      %v1274 = vpow.pop %v1273
      %v1275 = vmul.f32 %v1272, 1.442695
      %v1276 = vpow.pop %v1275
      %v1277 = vadd.f32 %v1274, 1.0
      %v1278 = vadd.f32 %v1276, 1.0
      %v1279 = vrcp.pop %v1277
      %v1280 = vrcp.pop %v1278
      %v1281 = vmul.f32 %v1269, %v1279
      %v1282 = vmul.f32 %v1270, %v1280
      %v1283 = vpack.c.bf16 %v1282, %v1281
      %v1284 = vld [vmem:[%s11] sm:$0xf]
      %v1285 = vld [vmem:[%s11 + $0x4] sm:$0xf]
      %v1286 = vld [vmem:[%s11 + $0x8] sm:$0xf]
      %v1287 = vld [vmem:[%s11 + $0xc] sm:$0xf]
      %v1288 = vld [vmem:[%s11 + $0x10] sm:$0xf]
      %v1289 = vld [vmem:[%s11 + $0x14] sm:$0xf]
      %v1290 = vld [vmem:[%s11 + $0x18] sm:$0xf]
      %v1291 = vld [vmem:[%s11 + $0x1c] sm:$0xf]
      %v1292 = vld [vmem:[#allocation2] sm:$0x1]
      %v1294 = vlaneseq
      %v1295 = vshrl.u32 %v1294, 7
      %v1296 = vsub.s32 0, %v1295
      %v1297 = vrot.slane %v1292, %v1296
      %1298 = vset.pattern.permute.xlu0 0
      %1299 = vperm.xlu0 %1298, %v1297
      %v1300 = vpop.permute.xlu0 %1299
      %v1310 = vunpack.c.l.b16 %v1284
      %v1311 = vunpack.c.l.b16 %v1285
      %v1312 = vunpack.c.l.b16 %v1286
      %v1313 = vunpack.c.l.b16 %v1287
      %v1314 = vunpack.c.l.b16 %v1288
      %v1315 = vunpack.c.l.b16 %v1289
      %v1316 = vunpack.c.l.b16 %v1290
      %v1317 = vunpack.c.l.b16 %v1291
      %v1318 = vpack.c.b16 %v1311, %v1310
      %v1319 = vpack.c.b16 %v1313, %v1312
      %v1320 = vpack.c.b16 %v1315, %v1314
      %v1321 = vpack.c.b16 %v1317, %v1316
      %v1327 = vsel %vm1217, %v1283, 0
      %1329 = vmatprep.subr.bf16.mxu0 0
      %1330 = vmatpush1.bf16.msra.mxu0 0
      %1331 = vmatprep.subr.bf16.mxu0 0
      %1332 = vmatpush1.bf16.msra.mxu0 0
      %1333 = vmatprep.subr.bf16.mxu0 0
      %1334 = vmatpush1.bf16.msra.mxu0 0
      %1335 = vmatprep.subr.bf16.mxu0 0
      %1336 = vmatpush1.bf16.msra.mxu0 0
      %1337 = vmatprep.subr.bf16.mxu0 0
      %1338 = vmatpush1.bf16.msra.mxu0 %v1321
      %1339 = vmatprep.subr.bf16.mxu0 0
      %1340 = vmatpush1.bf16.msra.mxu0 %v1320
      %1341 = vmatprep.subr.bf16.mxu0 0
      %1342 = vmatpush1.bf16.msra.mxu0 %v1319
      %1343 = vmatprep.subr.bf16.mxu0 0
      %1344 = vmatpush1.bf16.msra.mxu0 %v1318
      %1345 = vmatprep.subr.bf16.mxu0 0
      %1346 = vmatpush2.bf16.msra.mxu0 0
      %1347 = vmatprep.subr.bf16.mxu0 0
      %1348 = vmatpush2.bf16.msra.mxu0 0
      %1349 = vmatprep.subr.bf16.mxu0 0
      %1350 = vmatpush2.bf16.msra.mxu0 0
      %1351 = vmatprep.subr.bf16.mxu0 0
      %1352 = vmatpush2.bf16.msra.mxu0 0
      %1353 = vmatprep.subr.bf16.mxu0 0
      %1354 = vmatpush2.bf16.msra.mxu0 0
      %1355 = vmatprep.subr.bf16.mxu0 0
      %1356 = vmatpush2.bf16.msra.mxu0 0
      %1357 = vmatprep.subr.bf16.mxu0 0
      %1358 = vmatpush2.bf16.msra.mxu0 0
      %1359 = vmatprep.subr.bf16.mxu0 0
      %1360 = vmatpush2.bf16.msra.mxu0 0
      %1361 = vmatprep.mubr.bf16.mxu0 0
      %1362 = vmatmul.mubr.bf16.gmra.mxu0 %v1327
      %v1363 = vpop.f32.mrf.mxu0
      %v1364 = vadd.f32 %v1300, %v1363
      %v1365 = vpop.f32.mrf.mxu0
      %v1366 = vpop.f32.mrf.mxu0
      %v1367 = vadd.f32 %v1300, %v1366
      %v1368 = vpop.f32.mrf.mxu0
      %1369 = vdwg.mxu0
      %v1370 = vsub.f32 0.0, %v1364
      %v1371 = vsub.f32 0.0, %v1367
      %v1372 = vmul.f32 %v1370, 1.442695
      %v1373 = vpow.pop %v1372
      %v1374 = vmul.f32 %v1371, 1.442695
      %v1375 = vpow.pop %v1374
      %v1376 = vadd.f32 %v1373, 1.0
      %v1377 = vadd.f32 %v1375, 1.0
      %v1378 = vrcp.pop %v1376
      %v1379 = vrcp.pop %v1377
      %v1380 = vmul.f32 %v1364, %v1378
      %v1381 = vmul.f32 %v1367, %v1379
      %s1382 = scalar_lea.vmem %s537, 8
      %v1383 = vld [vmem:[%s1382] sm:$0xf]
      %v1384 = vld [vmem:[%s1382 + $0x4] sm:$0xf]
      %v1387 = vunpack.c.l.b16 %v1383
      %v1388 = vunpack.c.l.b16 %v1384
      %v1389 = vpack.c.b16 %v1388, %v1387
      %1391 = vmatprep.subr.bf16.mxu0 0
      %1392 = vmatpush1.bf16.msra.mxu0 %v930
      %1393 = vmatprep.subr.bf16.mxu0 0
      %1394 = vmatpush1.bf16.msra.mxu0 %v929
      %1395 = vmatprep.subr.bf16.mxu0 0
      %1396 = vmatpush1.bf16.msra.mxu0 %v928
      %1397 = vmatprep.subr.bf16.mxu0 0
      %1398 = vmatpush1.bf16.msra.mxu0 %v927
      %1399 = vmatprep.subr.bf16.mxu0 0
      %1400 = vmatpush1.bf16.msra.mxu0 %v926
      %1401 = vmatprep.subr.bf16.mxu0 0
      %1402 = vmatpush1.bf16.msra.mxu0 %v925
      %1403 = vmatprep.subr.bf16.mxu0 0
      %1404 = vmatpush1.bf16.msra.mxu0 %v924
      %1405 = vmatprep.subr.bf16.mxu0 0
      %1406 = vmatpush1.bf16.msra.mxu0 %v923
      %1407 = vmatprep.subr.bf16.mxu0 0
      %1408 = vmatpush2.bf16.msra.mxu0 0
      %1409 = vmatprep.subr.bf16.mxu0 0
      %1410 = vmatpush2.bf16.msra.mxu0 0
      %1411 = vmatprep.subr.bf16.mxu0 0
      %1412 = vmatpush2.bf16.msra.mxu0 0
      %1413 = vmatprep.subr.bf16.mxu0 0
      %1414 = vmatpush2.bf16.msra.mxu0 0
      %1415 = vmatprep.subr.bf16.mxu0 0
      %1416 = vmatpush2.bf16.msra.mxu0 0
      %1417 = vmatprep.subr.bf16.mxu0 0
      %1418 = vmatpush2.bf16.msra.mxu0 0
      %1419 = vmatprep.subr.bf16.mxu0 0
      %1420 = vmatpush2.bf16.msra.mxu0 0
      %1421 = vmatprep.subr.bf16.mxu0 0
      %1422 = vmatpush2.bf16.msra.mxu0 0
      %1423 = vmatprep.mubr.bf16.mxu0 0
      %1424 = vmatmul.mubr.bf16.gmra.mxu0 %v1389
      %v1425 = vpop.f32.mrf.mxu0
      %v1426 = vadd.f32 0.0, %v1425
      %v1427 = vpop.f32.mrf.mxu0
      %v1428 = vpop.f32.mrf.mxu0
      %v1429 = vadd.f32 0.0, %v1428
      %v1430 = vpop.f32.mrf.mxu0
      %1431 = vdwg.mxu0
      %v1432 = vadd.f32 %v861, %v1426
      %v1433 = vadd.f32 %v864, %v1429
      %v1434 = vadd.f32 %v1432, %v987
      %v1435 = vadd.f32 %v1433, %v987
      %v1436 = vsub.f32 0.0, %v1434
      %v1437 = vsub.f32 0.0, %v1435
      %v1438 = vmul.f32 %v1436, 1.442695
      %v1439 = vpow.pop %v1438
      %v1440 = vmul.f32 %v1437, 1.442695
      %v1441 = vpow.pop %v1440
      %v1442 = vadd.f32 %v1439, 1.0
      %v1443 = vadd.f32 %v1441, 1.0
      %v1444 = vrcp.pop %v1442
      %v1445 = vrcp.pop %v1443
      %v1446 = vmul.f32 %v1434, %v1444
      %v1447 = vmul.f32 %v1435, %v1445
      %v1448 = vpack.c.bf16 %v1447, %v1446
      %s1449 = scalar_lea.vmem %s548, 16
      %v1450 = vld [vmem:[%s1449] sm:$0xff]
      %v1451 = vld [vmem:[%s1449 + $0x8] sm:$0xff]
      %v1454 = vunpack.c.l.b16 %v1450
      %v1455 = vunpack.c.h.b16 %v1450
      %v1456 = vunpack.c.l.b16 %v1451
      %v1457 = vunpack.c.h.b16 %v1451
      %v1458 = vpack.c.b16 %v1456, %v1454
      %v1459 = vpack.c.b16 %v1457, %v1455
      %1462 = vmatprep.subr.bf16.mxu0 0
      %1463 = vmatpush1.bf16.msra.mxu0 %v1127
      %1464 = vmatprep.subr.bf16.mxu0 0
      %1465 = vmatpush1.bf16.msra.mxu0 %v1126
      %1466 = vmatprep.subr.bf16.mxu0 0
      %1467 = vmatpush1.bf16.msra.mxu0 %v1125
      %1468 = vmatprep.subr.bf16.mxu0 0
      %1469 = vmatpush1.bf16.msra.mxu0 %v1124
      %1470 = vmatprep.subr.bf16.mxu0 0
      %1471 = vmatpush1.bf16.msra.mxu0 %v1123
      %1472 = vmatprep.subr.bf16.mxu0 0
      %1473 = vmatpush1.bf16.msra.mxu0 %v1122
      %1474 = vmatprep.subr.bf16.mxu0 0
      %1475 = vmatpush1.bf16.msra.mxu0 %v1121
      %1476 = vmatprep.subr.bf16.mxu0 0
      %1477 = vmatpush1.bf16.msra.mxu0 %v1120
      %1478 = vmatprep.subr.bf16.mxu0 0
      %1479 = vmatpush2.bf16.msra.mxu0 %v1135
      %1480 = vmatprep.subr.bf16.mxu0 0
      %1481 = vmatpush2.bf16.msra.mxu0 %v1134
      %1482 = vmatprep.subr.bf16.mxu0 0
      %1483 = vmatpush2.bf16.msra.mxu0 %v1133
      %1484 = vmatprep.subr.bf16.mxu0 0
      %1485 = vmatpush2.bf16.msra.mxu0 %v1132
      %1486 = vmatprep.subr.bf16.mxu0 0
      %1487 = vmatpush2.bf16.msra.mxu0 %v1131
      %1488 = vmatprep.subr.bf16.mxu0 0
      %1489 = vmatpush2.bf16.msra.mxu0 %v1130
      %1490 = vmatprep.subr.bf16.mxu0 0
      %1491 = vmatpush2.bf16.msra.mxu0 %v1129
      %1492 = vmatprep.subr.bf16.mxu0 0
      %1493 = vmatpush2.bf16.msra.mxu0 %v1128
      %1494 = vmatprep.mubr.bf16.mxu0 %v1459
      %1495 = vmatmul.mubr.bf16.gmra.mxu0 %v1458
      %v1496 = vpop.f32.mrf.mxu0
      %v1497 = vadd.f32 0.0, %v1496
      %v1498 = vpop.f32.mrf.mxu0
      %v1499 = vpop.f32.mrf.mxu0
      %v1500 = vadd.f32 0.0, %v1499
      %v1501 = vpop.f32.mrf.mxu0
      %1502 = vdwg.mxu0
      %v1504 = vsel %vm1217, %v1448, 0
      %1506 = vmatprep.subr.bf16.mxu0 0
      %1507 = vmatpush1.bf16.msra.mxu0 0
      %1508 = vmatprep.subr.bf16.mxu0 0
      %1509 = vmatpush1.bf16.msra.mxu0 0
      %1510 = vmatprep.subr.bf16.mxu0 0
      %1511 = vmatpush1.bf16.msra.mxu0 0
      %1512 = vmatprep.subr.bf16.mxu0 0
      %1513 = vmatpush1.bf16.msra.mxu0 0
      %1514 = vmatprep.subr.bf16.mxu0 0
      %1515 = vmatpush1.bf16.msra.mxu0 %v1212
      %1516 = vmatprep.subr.bf16.mxu0 0
      %1517 = vmatpush1.bf16.msra.mxu0 %v1211
      %1518 = vmatprep.subr.bf16.mxu0 0
      %1519 = vmatpush1.bf16.msra.mxu0 %v1210
      %1520 = vmatprep.subr.bf16.mxu0 0
      %1521 = vmatpush1.bf16.msra.mxu0 %v1209
      %1522 = vmatprep.subr.bf16.mxu0 0
      %1523 = vmatpush2.bf16.msra.mxu0 0
      %1524 = vmatprep.subr.bf16.mxu0 0
      %1525 = vmatpush2.bf16.msra.mxu0 0
      %1526 = vmatprep.subr.bf16.mxu0 0
      %1527 = vmatpush2.bf16.msra.mxu0 0
      %1528 = vmatprep.subr.bf16.mxu0 0
      %1529 = vmatpush2.bf16.msra.mxu0 0
      %1530 = vmatprep.subr.bf16.mxu0 0
      %1531 = vmatpush2.bf16.msra.mxu0 0
      %1532 = vmatprep.subr.bf16.mxu0 0
      %1533 = vmatpush2.bf16.msra.mxu0 0
      %1534 = vmatprep.subr.bf16.mxu0 0
      %1535 = vmatpush2.bf16.msra.mxu0 0
      %1536 = vmatprep.subr.bf16.mxu0 0
      %1537 = vmatpush2.bf16.msra.mxu0 0
      %1538 = vmatprep.mubr.bf16.mxu0 0
      %1539 = vmatmul.mubr.bf16.gmra.mxu0 %v1504
      %v1540 = vpop.f32.mrf.mxu0
      %v1541 = vadd.f32 %v1497, %v1540
      %v1542 = vpop.f32.mrf.mxu0
      %v1543 = vpop.f32.mrf.mxu0
      %v1544 = vadd.f32 %v1500, %v1543
      %v1545 = vpop.f32.mrf.mxu0
      %1546 = vdwg.mxu0
      %v1547 = vadd.f32 %v1541, %v1267
      %v1548 = vadd.f32 %v1544, %v1267
      %v1549 = vsub.f32 0.0, %v1547
      %v1550 = vsub.f32 0.0, %v1548
      %v1551 = vmul.f32 %v1549, 1.442695
      %v1552 = vpow.pop %v1551
      %v1553 = vmul.f32 %v1550, 1.442695
      %v1554 = vpow.pop %v1553
      %v1555 = vadd.f32 %v1552, 1.0
      %v1556 = vadd.f32 %v1554, 1.0
      %v1557 = vrcp.pop %v1555
      %v1558 = vrcp.pop %v1556
      %v1559 = vmul.f32 %v1547, %v1557
      %v1560 = vmul.f32 %v1548, %v1558
      %v1561 = vpack.c.bf16 %v1560, %v1559
      %v1563 = vsel %vm1217, %v1561, 0
      %1565 = vmatprep.subr.bf16.mxu0 0
      %1566 = vmatpush1.bf16.msra.mxu0 0
      %1567 = vmatprep.subr.bf16.mxu0 0
      %1568 = vmatpush1.bf16.msra.mxu0 0
      %1569 = vmatprep.subr.bf16.mxu0 0
      %1570 = vmatpush1.bf16.msra.mxu0 0
      %1571 = vmatprep.subr.bf16.mxu0 0
      %1572 = vmatpush1.bf16.msra.mxu0 0
      %1573 = vmatprep.subr.bf16.mxu0 0
      %1574 = vmatpush1.bf16.msra.mxu0 %v1321
      %1575 = vmatprep.subr.bf16.mxu0 0
      %1576 = vmatpush1.bf16.msra.mxu0 %v1320
      %1577 = vmatprep.subr.bf16.mxu0 0
      %1578 = vmatpush1.bf16.msra.mxu0 %v1319
      %1579 = vmatprep.subr.bf16.mxu0 0
      %1580 = vmatpush1.bf16.msra.mxu0 %v1318
      %1581 = vmatprep.subr.bf16.mxu0 0
      %1582 = vmatpush2.bf16.msra.mxu0 0
      %1583 = vmatprep.subr.bf16.mxu0 0
      %1584 = vmatpush2.bf16.msra.mxu0 0
      %1585 = vmatprep.subr.bf16.mxu0 0
      %1586 = vmatpush2.bf16.msra.mxu0 0
      %1587 = vmatprep.subr.bf16.mxu0 0
      %1588 = vmatpush2.bf16.msra.mxu0 0
      %1589 = vmatprep.subr.bf16.mxu0 0
      %1590 = vmatpush2.bf16.msra.mxu0 0
      %1591 = vmatprep.subr.bf16.mxu0 0
      %1592 = vmatpush2.bf16.msra.mxu0 0
      %1593 = vmatprep.subr.bf16.mxu0 0
      %1594 = vmatpush2.bf16.msra.mxu0 0
      %1595 = vmatprep.subr.bf16.mxu0 0
      %1596 = vmatpush2.bf16.msra.mxu0 0
      %1597 = vmatprep.mubr.bf16.mxu0 0
      %1598 = vmatmul.mubr.bf16.gmra.mxu0 %v1563
      %v1599 = vpop.f32.mrf.mxu0
      %v1600 = vadd.f32 %v1300, %v1599
      %v1601 = vpop.f32.mrf.mxu0
      %v1602 = vpop.f32.mrf.mxu0
      %v1603 = vadd.f32 %v1300, %v1602
      %v1604 = vpop.f32.mrf.mxu0
      %1605 = vdwg.mxu0
      %v1606 = vsub.f32 0.0, %v1600
      %v1607 = vsub.f32 0.0, %v1603
      %v1608 = vmul.f32 %v1606, 1.442695
      %v1609 = vpow.pop %v1608
      %v1610 = vmul.f32 %v1607, 1.442695
      %v1611 = vpow.pop %v1610
      %v1612 = vadd.f32 %v1609, 1.0
      %v1613 = vadd.f32 %v1611, 1.0
      %v1614 = vrcp.pop %v1612
      %v1615 = vrcp.pop %v1613
      %v1616 = vmul.f32 %v1600, %v1614
      %v1617 = vmul.f32 %v1603, %v1615
      %s1618 = scalar_lea.vmem %s537, 16
      %v1619 = vld [vmem:[%s1618] sm:$0xf]
      %v1620 = vld [vmem:[%s1618 + $0x4] sm:$0xf]
      %v1623 = vunpack.c.l.b16 %v1619
      %v1624 = vunpack.c.l.b16 %v1620
      %v1625 = vpack.c.b16 %v1624, %v1623
      %1627 = vmatprep.subr.bf16.mxu0 0
      %1628 = vmatpush1.bf16.msra.mxu0 %v930
      %1629 = vmatprep.subr.bf16.mxu0 0
      %1630 = vmatpush1.bf16.msra.mxu0 %v929
      %1631 = vmatprep.subr.bf16.mxu0 0
      %1632 = vmatpush1.bf16.msra.mxu0 %v928
      %1633 = vmatprep.subr.bf16.mxu0 0
      %1634 = vmatpush1.bf16.msra.mxu0 %v927
      %1635 = vmatprep.subr.bf16.mxu0 0
      %1636 = vmatpush1.bf16.msra.mxu0 %v926
      %1637 = vmatprep.subr.bf16.mxu0 0
      %1638 = vmatpush1.bf16.msra.mxu0 %v925
      %1639 = vmatprep.subr.bf16.mxu0 0
      %1640 = vmatpush1.bf16.msra.mxu0 %v924
      %1641 = vmatprep.subr.bf16.mxu0 0
      %1642 = vmatpush1.bf16.msra.mxu0 %v923
      %1643 = vmatprep.subr.bf16.mxu0 0
      %1644 = vmatpush2.bf16.msra.mxu0 0
      %1645 = vmatprep.subr.bf16.mxu0 0
      %1646 = vmatpush2.bf16.msra.mxu0 0
      %1647 = vmatprep.subr.bf16.mxu0 0
      %1648 = vmatpush2.bf16.msra.mxu0 0
      %1649 = vmatprep.subr.bf16.mxu0 0
      %1650 = vmatpush2.bf16.msra.mxu0 0
      %1651 = vmatprep.subr.bf16.mxu0 0
      %1652 = vmatpush2.bf16.msra.mxu0 0
      %1653 = vmatprep.subr.bf16.mxu0 0
      %1654 = vmatpush2.bf16.msra.mxu0 0
      %1655 = vmatprep.subr.bf16.mxu0 0
      %1656 = vmatpush2.bf16.msra.mxu0 0
      %1657 = vmatprep.subr.bf16.mxu0 0
      %1658 = vmatpush2.bf16.msra.mxu0 0
      %1659 = vmatprep.mubr.bf16.mxu0 0
      %1660 = vmatmul.mubr.bf16.gmra.mxu0 %v1625
      %v1661 = vpop.f32.mrf.mxu0
      %v1662 = vadd.f32 0.0, %v1661
      %v1663 = vpop.f32.mrf.mxu0
      %v1664 = vpop.f32.mrf.mxu0
      %v1665 = vadd.f32 0.0, %v1664
      %v1666 = vpop.f32.mrf.mxu0
      %1667 = vdwg.mxu0
      %v1668 = vadd.f32 %v861, %v1662
      %v1669 = vadd.f32 %v864, %v1665
      %v1670 = vadd.f32 %v1668, %v987
      %v1671 = vadd.f32 %v1669, %v987
      %v1672 = vsub.f32 0.0, %v1670
      %v1673 = vsub.f32 0.0, %v1671
      %v1674 = vmul.f32 %v1672, 1.442695
      %v1675 = vpow.pop %v1674
      %v1676 = vmul.f32 %v1673, 1.442695
      %v1677 = vpow.pop %v1676
      %v1678 = vadd.f32 %v1675, 1.0
      %v1679 = vadd.f32 %v1677, 1.0
      %v1680 = vrcp.pop %v1678
      %v1681 = vrcp.pop %v1679
      %v1682 = vmul.f32 %v1670, %v1680
      %v1683 = vmul.f32 %v1671, %v1681
      %v1684 = vpack.c.bf16 %v1683, %v1682
      %s1685 = scalar_lea.vmem %s548, 32
      %v1686 = vld [vmem:[%s1685] sm:$0xff]
      %v1687 = vld [vmem:[%s1685 + $0x8] sm:$0xff]
      %v1690 = vunpack.c.l.b16 %v1686
      %v1691 = vunpack.c.h.b16 %v1686
      %v1692 = vunpack.c.l.b16 %v1687
      %v1693 = vunpack.c.h.b16 %v1687
      %v1694 = vpack.c.b16 %v1692, %v1690
      %v1695 = vpack.c.b16 %v1693, %v1691
      %1698 = vmatprep.subr.bf16.mxu0 0
      %1699 = vmatpush1.bf16.msra.mxu0 %v1127
      %1700 = vmatprep.subr.bf16.mxu0 0
      %1701 = vmatpush1.bf16.msra.mxu0 %v1126
      %1702 = vmatprep.subr.bf16.mxu0 0
      %1703 = vmatpush1.bf16.msra.mxu0 %v1125
      %1704 = vmatprep.subr.bf16.mxu0 0
      %1705 = vmatpush1.bf16.msra.mxu0 %v1124
      %1706 = vmatprep.subr.bf16.mxu0 0
      %1707 = vmatpush1.bf16.msra.mxu0 %v1123
      %1708 = vmatprep.subr.bf16.mxu0 0
      %1709 = vmatpush1.bf16.msra.mxu0 %v1122
      %1710 = vmatprep.subr.bf16.mxu0 0
      %1711 = vmatpush1.bf16.msra.mxu0 %v1121
      %1712 = vmatprep.subr.bf16.mxu0 0
      %1713 = vmatpush1.bf16.msra.mxu0 %v1120
      %1714 = vmatprep.subr.bf16.mxu0 0
      %1715 = vmatpush2.bf16.msra.mxu0 %v1135
      %1716 = vmatprep.subr.bf16.mxu0 0
      %1717 = vmatpush2.bf16.msra.mxu0 %v1134
      %1718 = vmatprep.subr.bf16.mxu0 0
      %1719 = vmatpush2.bf16.msra.mxu0 %v1133
      %1720 = vmatprep.subr.bf16.mxu0 0
      %1721 = vmatpush2.bf16.msra.mxu0 %v1132
      %1722 = vmatprep.subr.bf16.mxu0 0
      %1723 = vmatpush2.bf16.msra.mxu0 %v1131
      %1724 = vmatprep.subr.bf16.mxu0 0
      %1725 = vmatpush2.bf16.msra.mxu0 %v1130
      %1726 = vmatprep.subr.bf16.mxu0 0
      %1727 = vmatpush2.bf16.msra.mxu0 %v1129
      %1728 = vmatprep.subr.bf16.mxu0 0
      %1729 = vmatpush2.bf16.msra.mxu0 %v1128
      %1730 = vmatprep.mubr.bf16.mxu0 %v1695
      %1731 = vmatmul.mubr.bf16.gmra.mxu0 %v1694
      %v1732 = vpop.f32.mrf.mxu0
      %v1733 = vadd.f32 0.0, %v1732
      %v1734 = vpop.f32.mrf.mxu0
      %v1735 = vpop.f32.mrf.mxu0
      %v1736 = vadd.f32 0.0, %v1735
      %v1737 = vpop.f32.mrf.mxu0
      %1738 = vdwg.mxu0
      %v1740 = vsel %vm1217, %v1684, 0
      %1742 = vmatprep.subr.bf16.mxu0 0
      %1743 = vmatpush1.bf16.msra.mxu0 0
      %1744 = vmatprep.subr.bf16.mxu0 0
      %1745 = vmatpush1.bf16.msra.mxu0 0
      %1746 = vmatprep.subr.bf16.mxu0 0
      %1747 = vmatpush1.bf16.msra.mxu0 0
      %1748 = vmatprep.subr.bf16.mxu0 0
      %1749 = vmatpush1.bf16.msra.mxu0 0
      %1750 = vmatprep.subr.bf16.mxu0 0
      %1751 = vmatpush1.bf16.msra.mxu0 %v1212
      %1752 = vmatprep.subr.bf16.mxu0 0
      %1753 = vmatpush1.bf16.msra.mxu0 %v1211
      %1754 = vmatprep.subr.bf16.mxu0 0
      %1755 = vmatpush1.bf16.msra.mxu0 %v1210
      %1756 = vmatprep.subr.bf16.mxu0 0
      %1757 = vmatpush1.bf16.msra.mxu0 %v1209
      %1758 = vmatprep.subr.bf16.mxu0 0
      %1759 = vmatpush2.bf16.msra.mxu0 0
      %1760 = vmatprep.subr.bf16.mxu0 0
      %1761 = vmatpush2.bf16.msra.mxu0 0
      %1762 = vmatprep.subr.bf16.mxu0 0
      %1763 = vmatpush2.bf16.msra.mxu0 0
      %1764 = vmatprep.subr.bf16.mxu0 0
      %1765 = vmatpush2.bf16.msra.mxu0 0
      %1766 = vmatprep.subr.bf16.mxu0 0
      %1767 = vmatpush2.bf16.msra.mxu0 0
      %1768 = vmatprep.subr.bf16.mxu0 0
      %1769 = vmatpush2.bf16.msra.mxu0 0
      %1770 = vmatprep.subr.bf16.mxu0 0
      %1771 = vmatpush2.bf16.msra.mxu0 0
      %1772 = vmatprep.subr.bf16.mxu0 0
      %1773 = vmatpush2.bf16.msra.mxu0 0
      %1774 = vmatprep.mubr.bf16.mxu0 0
      %1775 = vmatmul.mubr.bf16.gmra.mxu0 %v1740
      %v1776 = vpop.f32.mrf.mxu0
      %v1777 = vadd.f32 %v1733, %v1776
      %v1778 = vpop.f32.mrf.mxu0
      %v1779 = vpop.f32.mrf.mxu0
      %v1780 = vadd.f32 %v1736, %v1779
      %v1781 = vpop.f32.mrf.mxu0
      %1782 = vdwg.mxu0
      %v1783 = vadd.f32 %v1777, %v1267
      %v1784 = vadd.f32 %v1780, %v1267
      %v1785 = vsub.f32 0.0, %v1783
      %v1786 = vsub.f32 0.0, %v1784
      %v1787 = vmul.f32 %v1785, 1.442695
      %v1788 = vpow.pop %v1787
      %v1789 = vmul.f32 %v1786, 1.442695
      %v1790 = vpow.pop %v1789
      %v1791 = vadd.f32 %v1788, 1.0
      %v1792 = vadd.f32 %v1790, 1.0
      %v1793 = vrcp.pop %v1791
      %v1794 = vrcp.pop %v1792
      %v1795 = vmul.f32 %v1783, %v1793
      %v1796 = vmul.f32 %v1784, %v1794
      %v1797 = vpack.c.bf16 %v1796, %v1795
      %v1799 = vsel %vm1217, %v1797, 0
      %1801 = vmatprep.subr.bf16.mxu0 0
      %1802 = vmatpush1.bf16.msra.mxu0 0
      %1803 = vmatprep.subr.bf16.mxu0 0
      %1804 = vmatpush1.bf16.msra.mxu0 0
      %1805 = vmatprep.subr.bf16.mxu0 0
      %1806 = vmatpush1.bf16.msra.mxu0 0
      %1807 = vmatprep.subr.bf16.mxu0 0
      %1808 = vmatpush1.bf16.msra.mxu0 0
      %1809 = vmatprep.subr.bf16.mxu0 0
      %1810 = vmatpush1.bf16.msra.mxu0 %v1321
      %1811 = vmatprep.subr.bf16.mxu0 0
      %1812 = vmatpush1.bf16.msra.mxu0 %v1320
      %1813 = vmatprep.subr.bf16.mxu0 0
      %1814 = vmatpush1.bf16.msra.mxu0 %v1319
      %1815 = vmatprep.subr.bf16.mxu0 0
      %1816 = vmatpush1.bf16.msra.mxu0 %v1318
      %1817 = vmatprep.subr.bf16.mxu0 0
      %1818 = vmatpush2.bf16.msra.mxu0 0
      %1819 = vmatprep.subr.bf16.mxu0 0
      %1820 = vmatpush2.bf16.msra.mxu0 0
      %1821 = vmatprep.subr.bf16.mxu0 0
      %1822 = vmatpush2.bf16.msra.mxu0 0
      %1823 = vmatprep.subr.bf16.mxu0 0
      %1824 = vmatpush2.bf16.msra.mxu0 0
      %1825 = vmatprep.subr.bf16.mxu0 0
      %1826 = vmatpush2.bf16.msra.mxu0 0
      %1827 = vmatprep.subr.bf16.mxu0 0
      %1828 = vmatpush2.bf16.msra.mxu0 0
      %1829 = vmatprep.subr.bf16.mxu0 0
      %1830 = vmatpush2.bf16.msra.mxu0 0
      %1831 = vmatprep.subr.bf16.mxu0 0
      %1832 = vmatpush2.bf16.msra.mxu0 0
      %1833 = vmatprep.mubr.bf16.mxu0 0
      %1834 = vmatmul.mubr.bf16.gmra.mxu0 %v1799
      %v1835 = vpop.f32.mrf.mxu0
      %v1836 = vadd.f32 %v1300, %v1835
      %v1837 = vpop.f32.mrf.mxu0
      %v1838 = vpop.f32.mrf.mxu0
      %v1839 = vadd.f32 %v1300, %v1838
      %v1840 = vpop.f32.mrf.mxu0
      %1841 = vdwg.mxu0
      %v1842 = vsub.f32 0.0, %v1836
      %v1843 = vsub.f32 0.0, %v1839
      %v1844 = vmul.f32 %v1842, 1.442695
      %v1845 = vpow.pop %v1844
      %v1846 = vmul.f32 %v1843, 1.442695
      %v1847 = vpow.pop %v1846
      %v1848 = vadd.f32 %v1845, 1.0
      %v1849 = vadd.f32 %v1847, 1.0
      %v1850 = vrcp.pop %v1848
      %v1851 = vrcp.pop %v1849
      %v1852 = vmul.f32 %v1836, %v1850
      %v1853 = vmul.f32 %v1839, %v1851
      %s1854 = scalar_lea.vmem %s537, 24
      %v1855 = vld [vmem:[%s1854] sm:$0xf]
      %v1856 = vld [vmem:[%s1854 + $0x4] sm:$0xf]
      %v1859 = vunpack.c.l.b16 %v1855
      %v1860 = vunpack.c.l.b16 %v1856
      %v1861 = vpack.c.b16 %v1860, %v1859
      %1863 = vmatprep.subr.bf16.mxu0 0
      %1864 = vmatpush1.bf16.msra.mxu0 %v930
      %1865 = vmatprep.subr.bf16.mxu0 0
      %1866 = vmatpush1.bf16.msra.mxu0 %v929
      %1867 = vmatprep.subr.bf16.mxu0 0
      %1868 = vmatpush1.bf16.msra.mxu0 %v928
      %1869 = vmatprep.subr.bf16.mxu0 0
      %1870 = vmatpush1.bf16.msra.mxu0 %v927
      %1871 = vmatprep.subr.bf16.mxu0 0
      %1872 = vmatpush1.bf16.msra.mxu0 %v926
      %1873 = vmatprep.subr.bf16.mxu0 0
      %1874 = vmatpush1.bf16.msra.mxu0 %v925
      %1875 = vmatprep.subr.bf16.mxu0 0
      %1876 = vmatpush1.bf16.msra.mxu0 %v924
      %1877 = vmatprep.subr.bf16.mxu0 0
      %1878 = vmatpush1.bf16.msra.mxu0 %v923
      %1879 = vmatprep.subr.bf16.mxu0 0
      %1880 = vmatpush2.bf16.msra.mxu0 0
      %1881 = vmatprep.subr.bf16.mxu0 0
      %1882 = vmatpush2.bf16.msra.mxu0 0
      %1883 = vmatprep.subr.bf16.mxu0 0
      %1884 = vmatpush2.bf16.msra.mxu0 0
      %1885 = vmatprep.subr.bf16.mxu0 0
      %1886 = vmatpush2.bf16.msra.mxu0 0
      %1887 = vmatprep.subr.bf16.mxu0 0
      %1888 = vmatpush2.bf16.msra.mxu0 0
      %1889 = vmatprep.subr.bf16.mxu0 0
      %1890 = vmatpush2.bf16.msra.mxu0 0
      %1891 = vmatprep.subr.bf16.mxu0 0
      %1892 = vmatpush2.bf16.msra.mxu0 0
      %1893 = vmatprep.subr.bf16.mxu0 0
      %1894 = vmatpush2.bf16.msra.mxu0 0
      %1895 = vmatprep.mubr.bf16.mxu0 0
      %1896 = vmatmul.mubr.bf16.gmra.mxu0 %v1861
      %v1897 = vpop.f32.mrf.mxu0
      %v1898 = vadd.f32 0.0, %v1897
      %v1899 = vpop.f32.mrf.mxu0
      %v1900 = vpop.f32.mrf.mxu0
      %v1901 = vadd.f32 0.0, %v1900
      %v1902 = vpop.f32.mrf.mxu0
      %1903 = vdwg.mxu0
      %v1904 = vadd.f32 %v861, %v1898
      %v1905 = vadd.f32 %v864, %v1901
      %v1906 = vadd.f32 %v1904, %v987
      %v1907 = vadd.f32 %v1905, %v987
      %v1908 = vsub.f32 0.0, %v1906
      %v1909 = vsub.f32 0.0, %v1907
      %v1910 = vmul.f32 %v1908, 1.442695
      %v1911 = vpow.pop %v1910
      %v1912 = vmul.f32 %v1909, 1.442695
      %v1913 = vpow.pop %v1912
      %v1914 = vadd.f32 %v1911, 1.0
      %v1915 = vadd.f32 %v1913, 1.0
      %v1916 = vrcp.pop %v1914
      %v1917 = vrcp.pop %v1915
      %v1918 = vmul.f32 %v1906, %v1916
      %v1919 = vmul.f32 %v1907, %v1917
      %v1920 = vpack.c.bf16 %v1919, %v1918
      %s1921 = scalar_lea.vmem %s548, 48
      %v1922 = vld [vmem:[%s1921] sm:$0xff]
      %v1923 = vld [vmem:[%s1921 + $0x8] sm:$0xff]
      %v1926 = vunpack.c.l.b16 %v1922
      %v1927 = vunpack.c.h.b16 %v1922
      %v1928 = vunpack.c.l.b16 %v1923
      %v1929 = vunpack.c.h.b16 %v1923
      %v1930 = vpack.c.b16 %v1928, %v1926
      %v1931 = vpack.c.b16 %v1929, %v1927
      %1934 = vmatprep.subr.bf16.mxu0 0
      %1935 = vmatpush1.bf16.msra.mxu0 %v1127
      %1936 = vmatprep.subr.bf16.mxu0 0
      %1937 = vmatpush1.bf16.msra.mxu0 %v1126
      %1938 = vmatprep.subr.bf16.mxu0 0
      %1939 = vmatpush1.bf16.msra.mxu0 %v1125
      %1940 = vmatprep.subr.bf16.mxu0 0
      %1941 = vmatpush1.bf16.msra.mxu0 %v1124
      %1942 = vmatprep.subr.bf16.mxu0 0
      %1943 = vmatpush1.bf16.msra.mxu0 %v1123
      %1944 = vmatprep.subr.bf16.mxu0 0
      %1945 = vmatpush1.bf16.msra.mxu0 %v1122
      %1946 = vmatprep.subr.bf16.mxu0 0
      %1947 = vmatpush1.bf16.msra.mxu0 %v1121
      %1948 = vmatprep.subr.bf16.mxu0 0
      %1949 = vmatpush1.bf16.msra.mxu0 %v1120
      %1950 = vmatprep.subr.bf16.mxu0 0
      %1951 = vmatpush2.bf16.msra.mxu0 %v1135
      %1952 = vmatprep.subr.bf16.mxu0 0
      %1953 = vmatpush2.bf16.msra.mxu0 %v1134
      %1954 = vmatprep.subr.bf16.mxu0 0
      %1955 = vmatpush2.bf16.msra.mxu0 %v1133
      %1956 = vmatprep.subr.bf16.mxu0 0
      %1957 = vmatpush2.bf16.msra.mxu0 %v1132
      %1958 = vmatprep.subr.bf16.mxu0 0
      %1959 = vmatpush2.bf16.msra.mxu0 %v1131
      %1960 = vmatprep.subr.bf16.mxu0 0
      %1961 = vmatpush2.bf16.msra.mxu0 %v1130
      %1962 = vmatprep.subr.bf16.mxu0 0
      %1963 = vmatpush2.bf16.msra.mxu0 %v1129
      %1964 = vmatprep.subr.bf16.mxu0 0
      %1965 = vmatpush2.bf16.msra.mxu0 %v1128
      %1966 = vmatprep.mubr.bf16.mxu0 %v1931
      %1967 = vmatmul.mubr.bf16.gmra.mxu0 %v1930
      %v1968 = vpop.f32.mrf.mxu0
      %v1969 = vadd.f32 0.0, %v1968
      %v1970 = vpop.f32.mrf.mxu0
      %v1971 = vpop.f32.mrf.mxu0
      %v1972 = vadd.f32 0.0, %v1971
      %v1973 = vpop.f32.mrf.mxu0
      %1974 = vdwg.mxu0
      %v1976 = vsel %vm1217, %v1920, 0
      %1978 = vmatprep.subr.bf16.mxu0 0
      %1979 = vmatpush1.bf16.msra.mxu0 0
      %1980 = vmatprep.subr.bf16.mxu0 0
      %1981 = vmatpush1.bf16.msra.mxu0 0
      %1982 = vmatprep.subr.bf16.mxu0 0
      %1983 = vmatpush1.bf16.msra.mxu0 0
      %1984 = vmatprep.subr.bf16.mxu0 0
      %1985 = vmatpush1.bf16.msra.mxu0 0
      %1986 = vmatprep.subr.bf16.mxu0 0
      %1987 = vmatpush1.bf16.msra.mxu0 %v1212
      %1988 = vmatprep.subr.bf16.mxu0 0
      %1989 = vmatpush1.bf16.msra.mxu0 %v1211
      %1990 = vmatprep.subr.bf16.mxu0 0
      %1991 = vmatpush1.bf16.msra.mxu0 %v1210
      %1992 = vmatprep.subr.bf16.mxu0 0
      %1993 = vmatpush1.bf16.msra.mxu0 %v1209
      %1994 = vmatprep.subr.bf16.mxu0 0
      %1995 = vmatpush2.bf16.msra.mxu0 0
      %1996 = vmatprep.subr.bf16.mxu0 0
      %1997 = vmatpush2.bf16.msra.mxu0 0
      %1998 = vmatprep.subr.bf16.mxu0 0
      %1999 = vmatpush2.bf16.msra.mxu0 0
      %2000 = vmatprep.subr.bf16.mxu0 0
      %2001 = vmatpush2.bf16.msra.mxu0 0
      %2002 = vmatprep.subr.bf16.mxu0 0
      %2003 = vmatpush2.bf16.msra.mxu0 0
      %2004 = vmatprep.subr.bf16.mxu0 0
      %2005 = vmatpush2.bf16.msra.mxu0 0
      %2006 = vmatprep.subr.bf16.mxu0 0
      %2007 = vmatpush2.bf16.msra.mxu0 0
      %2008 = vmatprep.subr.bf16.mxu0 0
      %2009 = vmatpush2.bf16.msra.mxu0 0
      %2010 = vmatprep.mubr.bf16.mxu0 0
      %2011 = vmatmul.mubr.bf16.gmra.mxu0 %v1976
      %v2012 = vpop.f32.mrf.mxu0
      %v2013 = vadd.f32 %v1969, %v2012
      %v2014 = vpop.f32.mrf.mxu0
      %v2015 = vpop.f32.mrf.mxu0
      %v2016 = vadd.f32 %v1972, %v2015
      %v2017 = vpop.f32.mrf.mxu0
      %2018 = vdwg.mxu0
      %v2019 = vadd.f32 %v2013, %v1267
      %v2020 = vadd.f32 %v2016, %v1267
      %v2021 = vsub.f32 0.0, %v2019
      %v2022 = vsub.f32 0.0, %v2020
      %v2023 = vmul.f32 %v2021, 1.442695
      %v2024 = vpow.pop %v2023
      %v2025 = vmul.f32 %v2022, 1.442695
      %v2026 = vpow.pop %v2025
      %v2027 = vadd.f32 %v2024, 1.0
      %v2028 = vadd.f32 %v2026, 1.0
      %v2029 = vrcp.pop %v2027
      %v2030 = vrcp.pop %v2028
      %v2031 = vmul.f32 %v2019, %v2029
      %v2032 = vmul.f32 %v2020, %v2030
      %v2033 = vpack.c.bf16 %v2032, %v2031
      %v2035 = vsel %vm1217, %v2033, 0
      %2037 = vmatprep.subr.bf16.mxu0 0
      %2038 = vmatpush1.bf16.msra.mxu0 0
      %2039 = vmatprep.subr.bf16.mxu0 0
      %2040 = vmatpush1.bf16.msra.mxu0 0
      %2041 = vmatprep.subr.bf16.mxu0 0
      %2042 = vmatpush1.bf16.msra.mxu0 0
      %2043 = vmatprep.subr.bf16.mxu0 0
      %2044 = vmatpush1.bf16.msra.mxu0 0
      %2045 = vmatprep.subr.bf16.mxu0 0
      %2046 = vmatpush1.bf16.msra.mxu0 %v1321
      %2047 = vmatprep.subr.bf16.mxu0 0
      %2048 = vmatpush1.bf16.msra.mxu0 %v1320
      %2049 = vmatprep.subr.bf16.mxu0 0
      %2050 = vmatpush1.bf16.msra.mxu0 %v1319
      %2051 = vmatprep.subr.bf16.mxu0 0
      %2052 = vmatpush1.bf16.msra.mxu0 %v1318
      %2053 = vmatprep.subr.bf16.mxu0 0
      %2054 = vmatpush2.bf16.msra.mxu0 0
      %2055 = vmatprep.subr.bf16.mxu0 0
      %2056 = vmatpush2.bf16.msra.mxu0 0
      %2057 = vmatprep.subr.bf16.mxu0 0
      %2058 = vmatpush2.bf16.msra.mxu0 0
      %2059 = vmatprep.subr.bf16.mxu0 0
      %2060 = vmatpush2.bf16.msra.mxu0 0
      %2061 = vmatprep.subr.bf16.mxu0 0
      %2062 = vmatpush2.bf16.msra.mxu0 0
      %2063 = vmatprep.subr.bf16.mxu0 0
      %2064 = vmatpush2.bf16.msra.mxu0 0
      %2065 = vmatprep.subr.bf16.mxu0 0
      %2066 = vmatpush2.bf16.msra.mxu0 0
      %2067 = vmatprep.subr.bf16.mxu0 0
      %2068 = vmatpush2.bf16.msra.mxu0 0
      %2069 = vmatprep.mubr.bf16.mxu0 0
      %2070 = vmatmul.mubr.bf16.gmra.mxu0 %v2035
      %v2071 = vpop.f32.mrf.mxu0
      %v2072 = vadd.f32 %v1300, %v2071
      %v2073 = vpop.f32.mrf.mxu0
      %v2074 = vpop.f32.mrf.mxu0
      %v2075 = vadd.f32 %v1300, %v2074
      %v2076 = vpop.f32.mrf.mxu0
      %2077 = vdwg.mxu0
      %v2078 = vsub.f32 0.0, %v2072
      %v2079 = vsub.f32 0.0, %v2075
      %v2080 = vmul.f32 %v2078, 1.442695
      %v2081 = vpow.pop %v2080
      %v2082 = vmul.f32 %v2079, 1.442695
      %v2083 = vpow.pop %v2082
      %v2084 = vadd.f32 %v2081, 1.0
      %v2085 = vadd.f32 %v2083, 1.0
      %v2086 = vrcp.pop %v2084
      %v2087 = vrcp.pop %v2085
      %v2088 = vmul.f32 %v2072, %v2086
      %v2089 = vmul.f32 %v2075, %v2087
      %2092 = vrot.lane.b32.xlu0 %v1616, 4
      %v2093 = vpop.permute.xlu0 %2092
      %2094 = vrot.lane.b32.xlu0 %v1617, 4
      %v2095 = vpop.permute.xlu0 %2094
      %2100 = vrot.lane.b32.xlu0 %v1852, 8
      %v2101 = vpop.permute.xlu0 %2100
      %2102 = vrot.lane.b32.xlu0 %v1853, 8
      %v2103 = vpop.permute.xlu0 %2102
      %2108 = vrot.lane.b32.xlu0 %v2088, 12
      %v2109 = vpop.permute.xlu0 %2108
      %2110 = vrot.lane.b32.xlu0 %v2089, 12
      %v2111 = vpop.permute.xlu0 %2110
      %vm2114 = vcmask 31744
      %v2115 = vsel %vm2114, %v1380, %v2093
      %v2116 = vsel %vm2114, %v1381, %v2095
      %vm2117 = vcmask 64512
      %v2118 = vsel %vm2117, %v2115, %v2101
      %v2119 = vsel %vm2117, %v2116, %v2103
      %vm2120 = vcmask 97280
      %v2121 = vsel %vm2120, %v2118, %v2109
      %v2122 = vsel %vm2120, %v2119, %v2111
      %vm2123 = vcmask 130048
      %2124 = vst.msk [vmem:[%s558] sm:$0xff] %vm2123, %v2121
      %2125 = vst.msk [vmem:[%s558 + $0x8] sm:$0xff] %vm2123, %v2122
      %s2126 = smul.u32 2, %s31
      %p2127 = scmp.lt.s32.totalorder %s30, 1
      %s2128 = scalar_select %p2127, %s30, 1
      %p2129 = scmp.lt.s32.totalorder %s2126, 1
      %s2130 = scalar_select %p2129, %s2126, 1
      %s2131 = smul.addr %s2128, 2
      %s2132 = sadd.s32 %s2130, %s2131
      %s2133 = smul.addr %s2132, 8
      %s2134 = scalar_lea.vmem %s13, %s2133
      // Predicated region
      $region73: #{seg_forward.1} parent=71 // pred_check
        %p2135 = pneg %p352
      $region74: #{seg_forward.1} parent=71 // pred_check_branch
        %2137 = sbr.rel (%p2135) target = $region76
      $region75: #{seg_forward.1} parent=71 // pred_region
        %s2138 = smul.u32 2, %s31
      $region76: #{seg_forward.1} parent=71 // pred_fallthru
        _
    $region72: #{seg_forward.1} parent=5 // pred_fallthru
      _
    %p2139 = scmp.le.s32.totalorder 2, %s21
    // Predicated region
    $region77: #{seg_forward.1} parent=5 // pred_check
      %p2140 = pneg %p2139
    $region78: #{seg_forward.1} parent=5 // pred_check_branch
      %2142 = sbr.rel (%p2140) target = $region80
    $region79: #{seg_forward.1} parent=5 // pred_region
      %s2143 = ssub.s32 %s21, 2
      // Predicated region
      $region81: #{seg_forward.1} parent=79 // pred_check
        %p2144 = pneg %p358
      $region82: #{seg_forward.1} parent=79 // pred_check_branch
        %2146 = sbr.rel (%p2144) target = $region84
      $region83: #{seg_forward.1} parent=79 // pred_region
        %s2147 = smul.u32 2, %s33
        %p2148 = scmp.lt.s32.totalorder %s32, 1
        %s2149 = scalar_select %p2148, %s32, 1
        %p2150 = scmp.lt.s32.totalorder %s2147, 1
        %s2151 = scalar_select %p2150, %s2147, 1
        %s2152 = smul.addr %s2149, 2
        %s2153 = sadd.s32 %s2151, %s2152
        %s2154 = smul.addr %s2153, 8
        %s2155 = scalar_lea.vmem %s13, %s2154
      $region84: #{seg_forward.1} parent=79 // pred_fallthru
        _
    $region80: #{seg_forward.1} parent=5 // pred_fallthru
      _
  $region6: #{seg_forward.1} parent=0 // loop_footer
    %s25 = sadd.s32 1, %s21
  $region7: #{seg_forward.1} parent=0 // loop_footer_branch
    %20 = sbr.rel target = $region3
  $region8: #{seg_forward.1} parent=0 // loop_exit
    _

</llo_original>
